<compile_context>
chip_gen: v7x
topology: tpu7x:2x2x1
jax: 0.10.0
libtpu: 0.0.40
codegen_flags: <defaults>
</compile_context>

<pallas_src>
import jax
import jax.numpy as jnp
from jax.experimental import pallas as pl
from jax.experimental.pallas import tpu as pltpu

TOKEN_DIM = 768
FEAT_DIM = 256
N_OFFENCE = 4
N_ACTION = 8
HEAD_PAD = 128          # offence|action logits packed into one lane-dense slab
LN_EPS = 1e-5


def _layer_norm(h, gamma, beta):
    mu = jnp.mean(h, axis=-1, keepdims=True)
    var = jnp.mean(jnp.square(h - mu), axis=-1, keepdims=True)
    return (h - mu) * jax.lax.rsqrt(var + LN_EPS) * gamma + beta


def _fused_kernel(vid_ref, wf_ref, bf_ref, wp_ref, bp_ref, g1_ref, be1_ref,
                  wh_ref, bh_ref, wi_ref, bi_ref, g2_ref, be2_ref,
                  wmh_ref, bmh_ref,
                  out_ref, acc_ref):
    """One batch element per step along grid axis 0, D*H*W tiled along axis 1.

    vid_ref : (1, V, C, dhw_tile)       native-dtype video tile
    out_ref : (1, V+1, HEAD_PAD)        rows 0..V-1 = per-view logits,
                                        row  V      = multi-view logits
                                        (each row = [offence(4) | action(8) | 0-pad])
    acc_ref : (V, C) f32 scratch        running GAP sum (1/N folded into wf)
    """
    k = pl.program_id(1)

    @pl.when(k == 0)
    def _init():
        acc_ref[...] = jnp.zeros_like(acc_ref)

    # Backbone stub partial GAP: accumulate per-(view, channel) sums for this tile.
    v = vid_ref[0].astype(jnp.float32)                                         # (V, C, dhw_tile)
    acc_ref[...] += jnp.sum(v, axis=-1)                                        # (V, C)

    @pl.when(k == pl.num_programs(1) - 1)
    def _finalize():
        pooled = acc_ref[...]                                                  # (V, C); 1/N already in wf
        # Backbone stub: Linear(C -> 768).
        feat = jnp.dot(pooled, wf_ref[...],
                       preferred_element_type=jnp.float32) + bf_ref[...]       # (V, 768)
        # drop_block: Dropout[id] -> Linear(768,256) -> LayerNorm -> Dropout[id]
        h = jnp.dot(feat.astype(wp_ref.dtype), wp_ref[...],
                    preferred_element_type=jnp.float32) + bp_ref[...]          # (V, 256)
        x = _layer_norm(h, g1_ref[...], be1_ref[...])
        # Fused fc_offence | fc_action heads (zero-padded to 128 lanes).
        single = (jnp.dot(x, wh_ref[...],
                          preferred_element_type=jnp.float32)
                  + bh_ref[...])                                               # (V, 128)
        # Multi-view path: max over views -> intern -> mv heads (fused epilogue).
        agg = jnp.max(x, axis=0, keepdims=True)                                # (1, 256)
        hi = jnp.dot(agg.astype(wi_ref.dtype), wi_ref[...],
                     preferred_element_type=jnp.float32) + bi_ref[...]
        hi = jnp.maximum(hi, 0.0)
        hn = _layer_norm(hi, g2_ref[...], be2_ref[...])
        mv = (jnp.dot(hn, wmh_ref[...],
                      preferred_element_type=jnp.float32)
              + bmh_ref[...])                                                  # (1, 128)
        # Single lane-dense store of the whole logits slab for this batch element.
        out_ref[0] = jnp.concatenate([single, mv], axis=0)                     # (V+1, 128)


def _pick_dhw_tile(dhw, per_lane_bytes, vmem_budget_bytes=8 << 20):
    """Largest multiple of 128 that divides dhw, whose double-buffered video
    block stays within `vmem_budget_bytes` (prefer >=2 pipeline steps); fall
    back to the full extent when dhw is not 128-aligned (full-dim block is
    always legal)."""
    if dhw % 128 != 0:
        return dhw
    budget_lanes = max(128, vmem_budget_bytes // (2 * per_lane_bytes))
    cap = min(budget_lanes, dhw // 2) if dhw >= 256 else dhw
    cap = max(cap, 128)
    best = 128
    t = 128
    while t <= cap:
        if dhw % t == 0:
            best = t
        t += 128
    return best


def _pack_heads(w_off, b_off, w_act, b_act):
    w = jnp.zeros((FEAT_DIM, HEAD_PAD), jnp.float32)
    w = w.at[:, :N_OFFENCE].set(w_off)
    w = w.at[:, N_OFFENCE:N_OFFENCE + N_ACTION].set(w_act)
    b = jnp.zeros((1, HEAD_PAD), jnp.float32)
    b = b.at[:, :N_OFFENCE].set(b_off)
    b = b.at[:, N_OFFENCE:N_OFFENCE + N_ACTION].set(b_act)
    return w, b


def init_params(key, in_channels):
    """Deterministic synthetic parameters.  PyTorch nn.Linear weights are
    (out, in); here they are stored transposed (in, out) so kernels do x @ W + b."""
    ks = jax.random.split(key, 7)

    def lin(k, fan_in, fan_out):
        scale = 1.0 / jnp.sqrt(jnp.float32(fan_in))
        w = jax.random.normal(k, (fan_in, fan_out), jnp.float32) * scale
        b = jnp.zeros((1, fan_out), jnp.float32)
        return w, b

    p = {}
    p['w_feat'], p['b_feat'] = lin(ks[0], in_channels, TOKEN_DIM)    # backbone stub
    w_proj, p['b_proj'] = lin(ks[1], TOKEN_DIM, FEAT_DIM)            # drop_block Linear
    p['w_proj'] = w_proj.astype(jnp.bfloat16)                        # bf16 weight: native MXU rate, half DMA
    p['ln1_g'] = jnp.ones((1, FEAT_DIM), jnp.float32)                # drop_block LayerNorm
    p['ln1_b'] = jnp.zeros((1, FEAT_DIM), jnp.float32)
    w_off, b_off = lin(ks[2], FEAT_DIM, N_OFFENCE)                   # fc_offence
    w_act, b_act = lin(ks[3], FEAT_DIM, N_ACTION)                    # fc_action
    p['w_heads'], p['b_heads'] = _pack_heads(w_off, b_off, w_act, b_act)
    w_int, p['b_int'] = lin(ks[4], FEAT_DIM, FEAT_DIM)               # intern Linear
    p['w_int'] = w_int.astype(jnp.bfloat16)
    p['ln2_g'] = jnp.ones((1, FEAT_DIM), jnp.float32)                # intern LayerNorm
    p['ln2_b'] = jnp.zeros((1, FEAT_DIM), jnp.float32)
    w_mvo, b_mvo = lin(ks[5], FEAT_DIM, N_OFFENCE)                   # fc_mv_offence
    w_mva, b_mva = lin(ks[6], FEAT_DIM, N_ACTION)                    # fc_mv_actions
    p['w_mv_heads'], p['b_mv_heads'] = _pack_heads(w_mvo, b_mvo, w_mva, b_mva)
    return p


def xin_multimodal_net_n15_forward(params, mvimages):
    B, V, C, D, H, W = mvimages.shape
    dhw = D * H * W
    # Metadata-only reshape; keep the native input dtype (cast happens in-kernel).
    vid = mvimages.reshape(B, V, C, dhw)

    per_lane_bytes = V * C * vid.dtype.itemsize
    dhw_tile = _pick_dhw_tile(dhw, per_lane_bytes)
    n_k = dhw // dhw_tile
    grid = (B, n_k)

    # Fold the 1/N of the global-average-pool into the (tiny) stub-backbone weight.
    wf = params['w_feat'] * jnp.float32(1.0 / dhw)

    def full(shape):
        return pl.BlockSpec(shape, lambda i, k, _n=len(shape): (0,) * _n)

    logits = pl.pallas_call(
        _fused_kernel,
        out_shape=jax.ShapeDtypeStruct((B, V + 1, HEAD_PAD), jnp.float32),
        grid_spec=pltpu.PrefetchScalarGridSpec(
            num_scalar_prefetch=0,
            grid=grid,
            in_specs=[
                pl.BlockSpec((1, V, C, dhw_tile), lambda i, k: (i, 0, 0, k)),
                full(wf.shape), full(params['b_feat'].shape),
                full(params['w_proj'].shape), full(params['b_proj'].shape),
                full(params['ln1_g'].shape), full(params['ln1_b'].shape),
                full(params['w_heads'].shape), full(params['b_heads'].shape),
                full(params['w_int'].shape), full(params['b_int'].shape),
                full(params['ln2_g'].shape), full(params['ln2_b'].shape),
                full(params['w_mv_heads'].shape), full(params['b_mv_heads'].shape),
            ],
            out_specs=pl.BlockSpec((1, V + 1, HEAD_PAD), lambda i, k: (i, 0, 0)),
            scratch_shapes=[pltpu.VMEM((V, C), jnp.float32)],
        ),
        compiler_params=pltpu.CompilerParams(
            dimension_semantics=("parallel", "arbitrary")),
    )(vid, wf, params['b_feat'],
      params['w_proj'], params['b_proj'],
      params['ln1_g'], params['ln1_b'],
      params['w_heads'], params['b_heads'],
      params['w_int'], params['b_int'],
      params['ln2_g'], params['ln2_b'],
      params['w_mv_heads'], params['b_mv_heads'])

    single_pad = logits[:, :V, :]       # (B, V, 128)
    mv_pad = logits[:, V, :]            # (B, 128)

    output_dict = {'mv_collection': {
        'offence_logits': mv_pad[:, :N_OFFENCE],
        'action_logits': mv_pad[:, N_OFFENCE:N_OFFENCE + N_ACTION],
    }}
    for i in range(V):
        output_dict[f'single_{i}'] = {
            'offence_logits': single_pad[:, i, :N_OFFENCE],
            'action_logits': single_pad[:, i, N_OFFENCE:N_OFFENCE + N_ACTION],
        }
    return output_dict


if __name__ == "__main__":
    key = jax.random.PRNGKey(0)
    k_param, k_data = jax.random.split(key)

    B, V, C, D, H, W = 2, 2, 4, 4, 16, 16
    params = init_params(k_param, C)
    mvimages = jax.random.normal(k_data, (B, V, C, D, H, W), jnp.float32)

    fwd = jax.jit(xin_multimodal_net_n15_forward)
    out = fwd(params, mvimages)
    out = jax.block_until_ready(out)

    # light sanity checks on shapes / values
    assert out['mv_collection']['offence_logits'].shape == (B, N_OFFENCE)
    assert out['mv_collection']['action_logits'].shape == (B, N_ACTION)
    for i in range(V):
        assert out[f'single_{i}']['offence_logits'].shape == (B, N_OFFENCE)
        assert out[f'single_{i}']['action_logits'].shape == (B, N_ACTION)
    assert all(bool(jnp.all(jnp.isfinite(v))) for d in out.values() for v in d.values())

    print("KERNEL_OK")
</pallas_src>

<mosaic_0001>
module attributes {stable_mosaic.version = 11 : i64} {
  func.func @_fused_kernel(%arg0: i32, %arg1: i32, %arg2: memref<1x2x4x512xf32, #tpu.memory_space<vmem>>, %arg3: memref<4x768xf32, #tpu.memory_space<vmem>>, %arg4: memref<1x768xf32, #tpu.memory_space<vmem>>, %arg5: memref<768x256xbf16, #tpu.memory_space<vmem>>, %arg6: memref<1x256xf32, #tpu.memory_space<vmem>>, %arg7: memref<1x256xf32, #tpu.memory_space<vmem>>, %arg8: memref<1x256xf32, #tpu.memory_space<vmem>>, %arg9: memref<256x128xf32, #tpu.memory_space<vmem>>, %arg10: memref<1x128xf32, #tpu.memory_space<vmem>>, %arg11: memref<256x256xbf16, #tpu.memory_space<vmem>>, %arg12: memref<1x256xf32, #tpu.memory_space<vmem>>, %arg13: memref<1x256xf32, #tpu.memory_space<vmem>>, %arg14: memref<1x256xf32, #tpu.memory_space<vmem>>, %arg15: memref<256x128xf32, #tpu.memory_space<vmem>>, %arg16: memref<1x128xf32, #tpu.memory_space<vmem>>, %arg17: memref<1x3x128xf32, #tpu.memory_space<vmem>>, %arg18: memref<2x4xf32, #tpu.memory_space<vmem>>) attributes {dimension_semantics = [#tpu.dimension_semantics<parallel>, #tpu.dimension_semantics<arbitrary>], iteration_bounds = array<i64: 2, 2>, scalar_prefetch = 0 : i64, scratch_operands = 1 : i64, tpu.core_type = #tpu.core_type<tc>, window_params = [{transform_indices = @transform_0, window_bounds = array<i64: 1, 2, 4, 512>}, {pipeline_mode = #tpu.pipeline_mode<synchronous>, transform_indices = @transform_1, window_bounds = array<i64: 4, 768>}, {pipeline_mode = #tpu.pipeline_mode<synchronous>, transform_indices = @transform_2, window_bounds = array<i64: 1, 768>}, {pipeline_mode = #tpu.pipeline_mode<synchronous>, transform_indices = @transform_3, window_bounds = array<i64: 768, 256>}, {pipeline_mode = #tpu.pipeline_mode<synchronous>, transform_indices = @transform_4, window_bounds = array<i64: 1, 256>}, {pipeline_mode = #tpu.pipeline_mode<synchronous>, transform_indices = @transform_5, window_bounds = array<i64: 1, 256>}, {pipeline_mode = #tpu.pipeline_mode<synchronous>, transform_indices = @transform_6, window_bounds = array<i64: 1, 256>}, {pipeline_mode = #tpu.pipeline_mode<synchronous>, transform_indices = @transform_7, window_bounds = array<i64: 256, 128>}, {pipeline_mode = #tpu.pipeline_mode<synchronous>, transform_indices = @transform_8, window_bounds = array<i64: 1, 128>}, {pipeline_mode = #tpu.pipeline_mode<synchronous>, transform_indices = @transform_9, window_bounds = array<i64: 256, 256>}, {pipeline_mode = #tpu.pipeline_mode<synchronous>, transform_indices = @transform_10, window_bounds = array<i64: 1, 256>}, {pipeline_mode = #tpu.pipeline_mode<synchronous>, transform_indices = @transform_11, window_bounds = array<i64: 1, 256>}, {pipeline_mode = #tpu.pipeline_mode<synchronous>, transform_indices = @transform_12, window_bounds = array<i64: 1, 256>}, {pipeline_mode = #tpu.pipeline_mode<synchronous>, transform_indices = @transform_13, window_bounds = array<i64: 256, 128>}, {pipeline_mode = #tpu.pipeline_mode<synchronous>, transform_indices = @transform_14, window_bounds = array<i64: 1, 128>}, {transform_indices = @transform_15, window_bounds = array<i64: 1, 3, 128>}]} {
    %c0_i32 = arith.constant 0 : i32
    %0 = arith.cmpi eq, %arg1, %c0_i32 : i32
    %1 = arith.extui %0 : i1 to i32
    %c0_i32_0 = arith.constant 0 : i32
    %2 = arith.cmpi ne, %1, %c0_i32_0 : i32
    scf.if %2 {
      %cst_9 = arith.constant 0.000000e+00 : f32
      %12 = vector.broadcast %cst_9 : f32 to vector<2x4xf32>
      %c0_10 = arith.constant 0 : index
      %c0_11 = arith.constant 0 : index
      %13 = vector.load %arg18[%c0_10, %c0_11] : memref<2x4xf32, #tpu.memory_space<vmem>>, vector<2x4xf32>
      tpu.vector_store %arg18[%c0_10, %c0_11], %12 {strides = array<i32>} : memref<2x4xf32, #tpu.memory_space<vmem>>, vector<2x4xf32>,
    } else {
    }
    %c0 = arith.constant 0 : index
    %c0_1 = arith.constant 0 : index
    %c0_2 = arith.constant 0 : index
    %c0_3 = arith.constant 0 : index
    %3 = vector.load %arg2[%c0, %c0_1, %c0_2, %c0_3] : memref<1x2x4x512xf32, #tpu.memory_space<vmem>>, vector<1x2x4x512xf32>
    %4 = vector.shape_cast %3 : vector<1x2x4x512xf32> to vector<2x4x512xf32>
    %c0_4 = arith.constant 0 : index
    %c0_5 = arith.constant 0 : index
    %5 = vector.load %arg18[%c0_4, %c0_5] : memref<2x4xf32, #tpu.memory_space<vmem>>, vector<2x4xf32>
    %cst = arith.constant dense<0.000000e+00> : vector<2x4xf32>
    %6 = vector.multi_reduction <add>, %4, %cst [2] : vector<2x4x512xf32> to vector<2x4xf32>
    %7 = arith.addf %5, %6 : vector<2x4xf32>
    %c0_6 = arith.constant 0 : index
    %c0_7 = arith.constant 0 : index
    %8 = vector.load %arg18[%c0_6, %c0_7] : memref<2x4xf32, #tpu.memory_space<vmem>>, vector<2x4xf32>
    tpu.vector_store %arg18[%c0_6, %c0_7], %7 {strides = array<i32>} : memref<2x4xf32, #tpu.memory_space<vmem>>, vector<2x4xf32>,
    %c1_i32 = arith.constant 1 : i32
    %9 = arith.cmpi eq, %arg1, %c1_i32 : i32
    %10 = arith.extui %9 : i1 to i32
    %c0_i32_8 = arith.constant 0 : i32
    %11 = arith.cmpi ne, %10, %c0_i32_8 : i32
    scf.if %11 {
      %c0_9 = arith.constant 0 : index
      %c0_10 = arith.constant 0 : index
      %12 = vector.load %arg18[%c0_9, %c0_10] : memref<2x4xf32, #tpu.memory_space<vmem>>, vector<2x4xf32>
      %c0_11 = arith.constant 0 : index
      %c0_12 = arith.constant 0 : index
      %13 = vector.load %arg3[%c0_11, %c0_12] : memref<4x768xf32, #tpu.memory_space<vmem>>, vector<4x768xf32>
      %cst_13 = arith.constant dense<0.000000e+00> : vector<2x768xf32>
      %14 = tpu.matmul %12, %13, %cst_13 {dimension_numbers = #tpu.dot_dimension_numbers<[1], [0], [0], [1], [0, 0, 1, 1], [], []>} : vector<2x4xf32>, vector<4x768xf32>, vector<2x768xf32> -> vector<2x768xf32>
      %c0_14 = arith.constant 0 : index
      %c0_15 = arith.constant 0 : index
      %15 = vector.load %arg4[%c0_14, %c0_15] : memref<1x768xf32, #tpu.memory_space<vmem>>, vector<1x768xf32>
      %16 = vector.broadcast %15 : vector<1x768xf32> to vector<2x768xf32>
      %17 = arith.addf %14, %16 : vector<2x768xf32>
      %18 = arith.truncf %17 : vector<2x768xf32> to vector<2x768xbf16>
      %c0_16 = arith.constant 0 : index
      %c0_17 = arith.constant 0 : index
      %19 = vector.load %arg5[%c0_16, %c0_17] : memref<768x256xbf16, #tpu.memory_space<vmem>>, vector<768x256xbf16>
      %cst_18 = arith.constant dense<0.000000e+00> : vector<2x256xf32>
      %20 = tpu.matmul %18, %19, %cst_18 {dimension_numbers = #tpu.dot_dimension_numbers<[1], [0], [0], [1], [0, 0, 1, 1], [], []>} : vector<2x768xbf16>, vector<768x256xbf16>, vector<2x256xf32> -> vector<2x256xf32>
      %c0_19 = arith.constant 0 : index
      %c0_20 = arith.constant 0 : index
      %21 = vector.load %arg6[%c0_19, %c0_20] : memref<1x256xf32, #tpu.memory_space<vmem>>, vector<1x256xf32>
      %22 = vector.broadcast %21 : vector<1x256xf32> to vector<2x256xf32>
      %23 = arith.addf %20, %22 : vector<2x256xf32>
      %c0_21 = arith.constant 0 : index
      %c0_22 = arith.constant 0 : index
      %24 = vector.load %arg7[%c0_21, %c0_22] : memref<1x256xf32, #tpu.memory_space<vmem>>, vector<1x256xf32>
      %c0_23 = arith.constant 0 : index
      %c0_24 = arith.constant 0 : index
      %25 = vector.load %arg8[%c0_23, %c0_24] : memref<1x256xf32, #tpu.memory_space<vmem>>, vector<1x256xf32>
      %cst_25 = arith.constant dense<0.000000e+00> : vector<2xf32>
      %26 = vector.multi_reduction <add>, %23, %cst_25 [1] : vector<2x256xf32> to vector<2xf32>
      %27 = vector.shape_cast %26 : vector<2xf32> to vector<2x1xf32>
      %cst_26 = arith.constant 2.560000e+02 : f32
      %28 = vector.broadcast %cst_26 : f32 to vector<2x1xf32>
      %29 = arith.divf %27, %28 : vector<2x1xf32>
      %30 = vector.broadcast %29 : vector<2x1xf32> to vector<2x256xf32>
      %31 = arith.subf %23, %30 : vector<2x256xf32>
      %32 = arith.mulf %31, %31 : vector<2x256xf32>
      %cst_27 = arith.constant dense<0.000000e+00> : vector<2xf32>
      %33 = vector.multi_reduction <add>, %32, %cst_27 [1] : vector<2x256xf32> to vector<2xf32>
      %34 = vector.shape_cast %33 : vector<2xf32> to vector<2x1xf32>
      %cst_28 = arith.constant 2.560000e+02 : f32
      %35 = vector.broadcast %cst_28 : f32 to vector<2x1xf32>
      %36 = arith.divf %34, %35 : vector<2x1xf32>
      %37 = vector.broadcast %29 : vector<2x1xf32> to vector<2x256xf32>
      %38 = arith.subf %23, %37 : vector<2x256xf32>
      %cst_29 = arith.constant 9.99999974E-6 : f32
      %39 = vector.broadcast %cst_29 : f32 to vector<2x1xf32>
      %40 = arith.addf %36, %39 : vector<2x1xf32>
      %41 = math.rsqrt %40 : vector<2x1xf32>
      %42 = vector.broadcast %41 : vector<2x1xf32> to vector<2x256xf32>
      %43 = arith.mulf %38, %42 : vector<2x256xf32>
      %44 = vector.broadcast %24 : vector<1x256xf32> to vector<2x256xf32>
      %45 = arith.mulf %43, %44 : vector<2x256xf32>
      %46 = vector.broadcast %25 : vector<1x256xf32> to vector<2x256xf32>
      %47 = arith.addf %45, %46 : vector<2x256xf32>
      %c0_30 = arith.constant 0 : index
      %c0_31 = arith.constant 0 : index
      %48 = vector.load %arg9[%c0_30, %c0_31] : memref<256x128xf32, #tpu.memory_space<vmem>>, vector<256x128xf32>
      %cst_32 = arith.constant dense<0.000000e+00> : vector<2x128xf32>
      %49 = tpu.matmul %47, %48, %cst_32 {dimension_numbers = #tpu.dot_dimension_numbers<[1], [0], [0], [1], [0, 0, 1, 1], [], []>} : vector<2x256xf32>, vector<256x128xf32>, vector<2x128xf32> -> vector<2x128xf32>
      %c0_33 = arith.constant 0 : index
      %c0_34 = arith.constant 0 : index
      %50 = vector.load %arg10[%c0_33, %c0_34] : memref<1x128xf32, #tpu.memory_space<vmem>>, vector<1x128xf32>
      %51 = vector.broadcast %50 : vector<1x128xf32> to vector<2x128xf32>
      %52 = arith.addf %49, %51 : vector<2x128xf32>
      %cst_35 = arith.constant dense<0xFF800000> : vector<256xf32>
      %53 = vector.multi_reduction <maximumf>, %47, %cst_35 [0] : vector<2x256xf32> to vector<256xf32>
      %54 = vector.shape_cast %53 : vector<256xf32> to vector<1x256xf32>
      %55 = arith.truncf %54 : vector<1x256xf32> to vector<1x256xbf16>
      %c0_36 = arith.constant 0 : index
      %c0_37 = arith.constant 0 : index
      %56 = vector.load %arg11[%c0_36, %c0_37] : memref<256x256xbf16, #tpu.memory_space<vmem>>, vector<256x256xbf16>
      %cst_38 = arith.constant dense<0.000000e+00> : vector<1x256xf32>
      %57 = tpu.matmul %55, %56, %cst_38 {dimension_numbers = #tpu.dot_dimension_numbers<[1], [0], [0], [1], [0, 0, 1, 1], [], []>} : vector<1x256xbf16>, vector<256x256xbf16>, vector<1x256xf32> -> vector<1x256xf32>
      %c0_39 = arith.constant 0 : index
      %c0_40 = arith.constant 0 : index
      %58 = vector.load %arg12[%c0_39, %c0_40] : memref<1x256xf32, #tpu.memory_space<vmem>>, vector<1x256xf32>
      %59 = arith.addf %57, %58 : vector<1x256xf32>
      %cst_41 = arith.constant 0.000000e+00 : f32
      %60 = vector.broadcast %cst_41 : f32 to vector<1x256xf32>
      %61 = arith.maximumf %59, %60 : vector<1x256xf32>
      %c0_42 = arith.constant 0 : index
      %c0_43 = arith.constant 0 : index
      %62 = vector.load %arg13[%c0_42, %c0_43] : memref<1x256xf32, #tpu.memory_space<vmem>>, vector<1x256xf32>
      %c0_44 = arith.constant 0 : index
      %c0_45 = arith.constant 0 : index
      %63 = vector.load %arg14[%c0_44, %c0_45] : memref<1x256xf32, #tpu.memory_space<vmem>>, vector<1x256xf32>
      %cst_46 = arith.constant dense<0.000000e+00> : vector<1xf32>
      %64 = vector.multi_reduction <add>, %61, %cst_46 [1] : vector<1x256xf32> to vector<1xf32>
      %65 = vector.shape_cast %64 : vector<1xf32> to vector<1x1xf32>
      %cst_47 = arith.constant 2.560000e+02 : f32
      %66 = vector.broadcast %cst_47 : f32 to vector<1x1xf32>
      %67 = arith.divf %65, %66 : vector<1x1xf32>
      %68 = vector.broadcast %67 : vector<1x1xf32> to vector<1x256xf32>
      %69 = arith.subf %61, %68 : vector<1x256xf32>
      %70 = arith.mulf %69, %69 : vector<1x256xf32>
      %cst_48 = arith.constant dense<0.000000e+00> : vector<1xf32>
      %71 = vector.multi_reduction <add>, %70, %cst_48 [1] : vector<1x256xf32> to vector<1xf32>
      %72 = vector.shape_cast %71 : vector<1xf32> to vector<1x1xf32>
      %cst_49 = arith.constant 2.560000e+02 : f32
      %73 = vector.broadcast %cst_49 : f32 to vector<1x1xf32>
      %74 = arith.divf %72, %73 : vector<1x1xf32>
      %75 = vector.broadcast %67 : vector<1x1xf32> to vector<1x256xf32>
      %76 = arith.subf %61, %75 : vector<1x256xf32>
      %cst_50 = arith.constant 9.99999974E-6 : f32
      %77 = vector.broadcast %cst_50 : f32 to vector<1x1xf32>
      %78 = arith.addf %74, %77 : vector<1x1xf32>
      %79 = math.rsqrt %78 : vector<1x1xf32>
      %80 = vector.broadcast %79 : vector<1x1xf32> to vector<1x256xf32>
      %81 = arith.mulf %76, %80 : vector<1x256xf32>
      %82 = arith.mulf %81, %62 : vector<1x256xf32>
      %83 = arith.addf %82, %63 : vector<1x256xf32>
      %c0_51 = arith.constant 0 : index
      %c0_52 = arith.constant 0 : index
      %84 = vector.load %arg15[%c0_51, %c0_52] : memref<256x128xf32, #tpu.memory_space<vmem>>, vector<256x128xf32>
      %cst_53 = arith.constant dense<0.000000e+00> : vector<1x128xf32>
      %85 = tpu.matmul %83, %84, %cst_53 {dimension_numbers = #tpu.dot_dimension_numbers<[1], [0], [0], [1], [0, 0, 1, 1], [], []>} : vector<1x256xf32>, vector<256x128xf32>, vector<1x128xf32> -> vector<1x128xf32>
      %c0_54 = arith.constant 0 : index
      %c0_55 = arith.constant 0 : index
      %86 = vector.load %arg16[%c0_54, %c0_55] : memref<1x128xf32, #tpu.memory_space<vmem>>, vector<1x128xf32>
      %87 = arith.addf %85, %86 : vector<1x128xf32>
      %88 = tpu.concatenate %52, %87 in 0 : vector<2x128xf32>, vector<1x128xf32> -> vector<3x128xf32>
      %c0_56 = arith.constant 0 : index
      %c0_57 = arith.constant 0 : index
      %c0_58 = arith.constant 0 : index
      %89 = vector.load %arg17[%c0_56, %c0_57, %c0_58] : memref<1x3x128xf32, #tpu.memory_space<vmem>>, vector<1x3x128xf32>
      %90 = vector.shape_cast %89 : vector<1x3x128xf32> to vector<3x128xf32>
      %91 = vector.shape_cast %88 : vector<3x128xf32> to vector<1x3x128xf32>
      tpu.vector_store %arg17[%c0_56, %c0_57, %c0_58], %91 {strides = array<i32>} : memref<1x3x128xf32, #tpu.memory_space<vmem>>, vector<1x3x128xf32>,
    } else {
    }
    return
  }
  func.func @transform_0(%arg0: i32, %arg1: i32) -> (i32, i32, i32, i32) {
    %c0_i32 = arith.constant 0 : i32
    %c0_i32_0 = arith.constant 0 : i32
    %c0_i32_1 = arith.constant 0 : i32
    return %arg0, %c0_i32, %c0_i32_0, %arg1 : i32, i32, i32, i32
  }
  func.func @transform_1(%arg0: i32, %arg1: i32) -> (i32, i32) {
    %c0_i32 = arith.constant 0 : i32
    %c0_i32_0 = arith.constant 0 : i32
    %c0_i32_1 = arith.constant 0 : i32
    return %c0_i32, %c0_i32_0 : i32, i32
  }
  func.func @transform_2(%arg0: i32, %arg1: i32) -> (i32, i32) {
    %c0_i32 = arith.constant 0 : i32
    %c0_i32_0 = arith.constant 0 : i32
    %c0_i32_1 = arith.constant 0 : i32
    return %c0_i32, %c0_i32_0 : i32, i32
  }
  func.func @transform_3(%arg0: i32, %arg1: i32) -> (i32, i32) {
    %c0_i32 = arith.constant 0 : i32
    %c0_i32_0 = arith.constant 0 : i32
    %c0_i32_1 = arith.constant 0 : i32
    return %c0_i32, %c0_i32_0 : i32, i32
  }
  func.func @transform_4(%arg0: i32, %arg1: i32) -> (i32, i32) {
    %c0_i32 = arith.constant 0 : i32
    %c0_i32_0 = arith.constant 0 : i32
    %c0_i32_1 = arith.constant 0 : i32
    return %c0_i32, %c0_i32_0 : i32, i32
  }
  func.func @transform_5(%arg0: i32, %arg1: i32) -> (i32, i32) {
    %c0_i32 = arith.constant 0 : i32
    %c0_i32_0 = arith.constant 0 : i32
    %c0_i32_1 = arith.constant 0 : i32
    return %c0_i32, %c0_i32_0 : i32, i32
  }
  func.func @transform_6(%arg0: i32, %arg1: i32) -> (i32, i32) {
    %c0_i32 = arith.constant 0 : i32
    %c0_i32_0 = arith.constant 0 : i32
    %c0_i32_1 = arith.constant 0 : i32
    return %c0_i32, %c0_i32_0 : i32, i32
  }
  func.func @transform_7(%arg0: i32, %arg1: i32) -> (i32, i32) {
    %c0_i32 = arith.constant 0 : i32
    %c0_i32_0 = arith.constant 0 : i32
    %c0_i32_1 = arith.constant 0 : i32
    return %c0_i32, %c0_i32_0 : i32, i32
  }
  func.func @transform_8(%arg0: i32, %arg1: i32) -> (i32, i32) {
    %c0_i32 = arith.constant 0 : i32
    %c0_i32_0 = arith.constant 0 : i32
    %c0_i32_1 = arith.constant 0 : i32
    return %c0_i32, %c0_i32_0 : i32, i32
  }
  func.func @transform_9(%arg0: i32, %arg1: i32) -> (i32, i32) {
    %c0_i32 = arith.constant 0 : i32
    %c0_i32_0 = arith.constant 0 : i32
    %c0_i32_1 = arith.constant 0 : i32
    return %c0_i32, %c0_i32_0 : i32, i32
  }
  func.func @transform_10(%arg0: i32, %arg1: i32) -> (i32, i32) {
    %c0_i32 = arith.constant 0 : i32
    %c0_i32_0 = arith.constant 0 : i32
    %c0_i32_1 = arith.constant 0 : i32
    return %c0_i32, %c0_i32_0 : i32, i32
  }
  func.func @transform_11(%arg0: i32, %arg1: i32) -> (i32, i32) {
    %c0_i32 = arith.constant 0 : i32
    %c0_i32_0 = arith.constant 0 : i32
    %c0_i32_1 = arith.constant 0 : i32
    return %c0_i32, %c0_i32_0 : i32, i32
  }
  func.func @transform_12(%arg0: i32, %arg1: i32) -> (i32, i32) {
    %c0_i32 = arith.constant 0 : i32
    %c0_i32_0 = arith.constant 0 : i32
    %c0_i32_1 = arith.constant 0 : i32
    return %c0_i32, %c0_i32_0 : i32, i32
  }
  func.func @transform_13(%arg0: i32, %arg1: i32) -> (i32, i32) {
    %c0_i32 = arith.constant 0 : i32
    %c0_i32_0 = arith.constant 0 : i32
    %c0_i32_1 = arith.constant 0 : i32
    return %c0_i32, %c0_i32_0 : i32, i32
  }
  func.func @transform_14(%arg0: i32, %arg1: i32) -> (i32, i32) {
    %c0_i32 = arith.constant 0 : i32
    %c0_i32_0 = arith.constant 0 : i32
    %c0_i32_1 = arith.constant 0 : i32
    return %c0_i32, %c0_i32_0 : i32, i32
  }
  func.func @transform_15(%arg0: i32, %arg1: i32) -> (i32, i32, i32) {
    %c0_i32 = arith.constant 0 : i32
    %c0_i32_0 = arith.constant 0 : i32
    %c0_i32_1 = arith.constant 0 : i32
    return %arg0, %c0_i32, %c0_i32_0 : i32, i32, i32
  }
}

</mosaic_0001>

<llo_original>
// kernel: xin_multimodal_net_n15_forward.1
$region0: #{xin_multimodal_net_n15_forward.1}
  #allocation0 [shape = 'u32[]', space=smem, size = 0x4, offset = 0x4, fixed_abs, tag = 'smem constant byte address 0x4 - core index']
  #allocation1 [shape = 'u32[144,128]{1,0:T(1,128)}', space=vmem, size = 0x12000, scoped, tag = 'internal scratch']
  #allocation2 [shape = 'f32[2,4]{1,0:T(2,128)}', space=vmem, size = 0x400, scoped, tag = 'scratch operand']
  %s0 = inlined_call_operand.vmem [shape: f32[2,2,4,1024], index: 0, kind: input, shape index: {}]
  %s1 = inlined_call_operand.vmem [shape: f32[4,768], index: 1, kind: input, shape index: {}]
  %s2 = inlined_call_operand.vmem [shape: f32[1,768], index: 2, kind: input, shape index: {}]
  %s3 = inlined_call_operand.vmem [shape: bf16[768,256], index: 3, kind: input, shape index: {}]
  %s4 = inlined_call_operand.vmem [shape: f32[1,256], index: 4, kind: input, shape index: {}]
  %s5 = inlined_call_operand.vmem [shape: f32[1,256], index: 5, kind: input, shape index: {}]
  %s6 = inlined_call_operand.vmem [shape: f32[1,256], index: 6, kind: input, shape index: {}]
  %s7 = inlined_call_operand.vmem [shape: f32[256,128], index: 7, kind: input, shape index: {}]
  %s8 = inlined_call_operand.vmem [shape: f32[1,128], index: 8, kind: input, shape index: {}]
  %s9 = inlined_call_operand.hbm [shape: bf16[256,256], index: 9, kind: input, shape index: {}]
  %s10 = inlined_call_operand.vmem [shape: f32[1,256], index: 10, kind: input, shape index: {}]
  %s11 = inlined_call_operand.vmem [shape: f32[1,256], index: 11, kind: input, shape index: {}]
  %s12 = inlined_call_operand.vmem [shape: f32[1,256], index: 12, kind: input, shape index: {}]
  %s13 = inlined_call_operand.hbm [shape: f32[256,128], index: 13, kind: input, shape index: {}]
  %s14 = inlined_call_operand.vmem [shape: f32[1,128], index: 14, kind: input, shape index: {}]
  %s15 = inlined_call_operand.vmem [shape: f32[2,3,128], index: 15, kind: output, shape index: {}]
  %s16 = sld [smem:[#allocation0]]
  $region132: #{xin_multimodal_net_n15_forward.1} parent=0
    _
  %s18 = ssub.s32 1, %s16
  %s19 = scalar_select 0, %s18, %s16
  $region1: #{xin_multimodal_net_n15_forward.1} parent=0
    #allocation3 [shape = 'u8[32768]{0}', space=vmem, size = 0x8000, scoped, tag = 'input window, operand 0']
    #allocation4 [shape = 'u8[131072]{0}', space=vmem, size = 0x20000, scoped, tag = 'input window, operand 9, single buffered']
    #allocation5 [shape = 's32[2]{0}', space=sflag, size = 0x8, scoped, tag = 'scoped memory for xin_multimodal_net_n15_forward.1']
    #allocation6 [shape = 'u8[131072]{0}', space=vmem, size = 0x20000, scoped, tag = 'input window, operand 13, single buffered']
    #allocation7 [shape = 's32[1]{0}', space=sflag, size = 0x4, scoped, tag = 'scoped memory for xin_multimodal_net_n15_forward.1']
    %20 = vsyncpa [#allocation5], 0
    %21 = vsyncpa [#allocation7], 0
    loop: start=0, step=1, limit=6
    $region2: #{xin_multimodal_net_n15_forward.1} parent=1 // loop_pre_header
      _
    $region3: #{xin_multimodal_net_n15_forward.1} parent=1 // loop_header
      %s23 = sphi 0, %s27
      %p24 = scmp.ge.s32.totalorder %s23, 6
      %s30 = sphi 0, %s42
      %s31 = sphi 0, %s38
      %s32 = sphi 0, %s30
      %s33 = sphi 0, %s31
      %s34 = sphi 0, %s32
      %s35 = sphi 0, %s33
      %s47 = sphi 0, %s49
      %s50 = sphi 0, %s47
      %s51 = sphi 0, %s50
      %s67 = sphi 0, %s51
      %s71 = sphi 0, %s71
      %s73 = sphi 0, %s71
      %s74 = sphi 0, %s73
      %s88 = sphi 0, %s74
      %s92 = sphi 0, %s92
      %s94 = sphi 0, %s92
      %s95 = sphi 0, %s94
      %s109 = sphi 0, %s95
      %s113 = sphi 0, %s113
      %s115 = sphi 0, %s113
      %s116 = sphi 0, %s115
      %s130 = sphi 0, %s116
      %s134 = sphi 0, %s134
      %s136 = sphi 0, %s134
      %s137 = sphi 0, %s136
      %s151 = sphi 0, %s137
      %s155 = sphi 0, %s155
      %s157 = sphi 0, %s155
      %s158 = sphi 0, %s157
      %s172 = sphi 0, %s158
      %s176 = sphi 0, %s176
      %s178 = sphi 0, %s176
      %s179 = sphi 0, %s178
      %s193 = sphi 0, %s179
      %s197 = sphi 0, %s197
      %s199 = sphi 0, %s197
      %s200 = sphi 0, %s199
      %s214 = sphi 0, %s200
      %s218 = sphi 0, %s218
      %s220 = sphi 0, %s218
      %s221 = sphi 0, %s220
      %s235 = sphi 0, %s221
      %s239 = sphi 0, %s239
      %s241 = sphi 0, %s239
      %s242 = sphi 0, %s241
      %s256 = sphi 0, %s242
      %s260 = sphi 0, %s260
      %s262 = sphi 0, %s260
      %s263 = sphi 0, %s262
      %s277 = sphi 0, %s263
      %s281 = sphi 0, %s281
      %s283 = sphi 0, %s281
      %s284 = sphi 0, %s283
      %s298 = sphi 0, %s284
      %s302 = sphi 0, %s302
      %s304 = sphi 0, %s302
      %s305 = sphi 0, %s304
      %s319 = sphi 0, %s305
      %s323 = sphi 0, %s323
      %s325 = sphi 0, %s323
      %s326 = sphi 0, %s325
      %s340 = sphi 0, %s326
      %s344 = sphi 0, %s344
      %s346 = sphi 0, %s344
      %s347 = sphi 0, %s346
      %s361 = sphi 0, %s347
      %s367 = sphi 0, %s369
      %s370 = sphi 0, %s367
      %s371 = sphi 0, %s370
      %s387 = sphi 0, %s371
    $region4: #{xin_multimodal_net_n15_forward.1} parent=1 // loop_header_branch
      %26 = sbr.rel (%p24) target = $region8
    $region5: #{xin_multimodal_net_n15_forward.1} parent=1 // loop_body
      %s28 = ssub.s32 %s23, 1
      %s29 = ssub.s32 %s23, 2
      %s36 = sadd.s32 1, %s31
      %p37 = scmp.ge.s32.totalorder %s36, 2
      %s38 = scalar_select %p37, 0, %s36
      %s39 = sadd.s32 1, %s30
      %s40 = scalar_select %p37, %s39, %s30
      %p41 = scmp.ge.s32.totalorder %s40, 2
      %s42 = scalar_select %p41, 0, %s40
      %s43 = ssub.s32 %s30, %s42
      %s44 = ssub.s32 %s31, %s38
      %s45 = sor.u32 %s43, %s44
      %p46 = scmp.eq.s32.totalorder %s45, 0
      %s48 = sadd.s32 %s47, 1
      %s49 = scalar_select %p46, %s47, %s48
      %p52 = pneg %p46
      %p53 = scmp.eq.s32.totalorder %s23, 3
      %p54 = por %p52, %p53
      %p55 = scmp.ne.s32.totalorder %s47, %s50
      %p56 = scmp.eq.s32.totalorder %s23, 0
      %p57 = por %p55, %p56
      %p58 = scmp.ne.s32.totalorder %s47, %s50
      %p59 = scmp.eq.s32.totalorder %s28, 3
      %p60 = por %p58, %p59
      %p61 = scmp.ne.s32.totalorder %s50, %s51
      %p62 = scmp.eq.s32.totalorder %s28, 0
      %p63 = por %p61, %p62
      %p64 = scmp.ne.s32.totalorder %s50, %s51
      %p65 = scmp.eq.s32.totalorder %s29, 3
      %p66 = por %p64, %p65
      %p68 = scmp.ne.s32.totalorder %s51, %s67
      %p69 = scmp.eq.s32.totalorder %s29, 0
      %p70 = por %p68, %p69
      %s72 = sadd.s32 %s71, 1
      %p75 = scmp.eq.s32.totalorder %s23, 3
      %p76 = scmp.ne.s32.totalorder %s71, %s73
      %p77 = scmp.eq.s32.totalorder %s23, 0
      %p78 = por %p76, %p77
      %p79 = scmp.ne.s32.totalorder %s71, %s73
      %p80 = scmp.eq.s32.totalorder %s28, 3
      %p81 = por %p79, %p80
      %p82 = scmp.ne.s32.totalorder %s73, %s74
      %p83 = scmp.eq.s32.totalorder %s28, 0
      %p84 = por %p82, %p83
      %p85 = scmp.ne.s32.totalorder %s73, %s74
      %p86 = scmp.eq.s32.totalorder %s29, 3
      %p87 = por %p85, %p86
      %p89 = scmp.ne.s32.totalorder %s74, %s88
      %p90 = scmp.eq.s32.totalorder %s29, 0
      %p91 = por %p89, %p90
      %s93 = sadd.s32 %s92, 1
      %p96 = scmp.eq.s32.totalorder %s23, 3
      %p97 = scmp.ne.s32.totalorder %s92, %s94
      %p98 = scmp.eq.s32.totalorder %s23, 0
      %p99 = por %p97, %p98
      %p100 = scmp.ne.s32.totalorder %s92, %s94
      %p101 = scmp.eq.s32.totalorder %s28, 3
      %p102 = por %p100, %p101
      %p103 = scmp.ne.s32.totalorder %s94, %s95
      %p104 = scmp.eq.s32.totalorder %s28, 0
      %p105 = por %p103, %p104
      %p106 = scmp.ne.s32.totalorder %s94, %s95
      %p107 = scmp.eq.s32.totalorder %s29, 3
      %p108 = por %p106, %p107
      %p110 = scmp.ne.s32.totalorder %s95, %s109
      %p111 = scmp.eq.s32.totalorder %s29, 0
      %p112 = por %p110, %p111
      %s114 = sadd.s32 %s113, 1
      %p117 = scmp.eq.s32.totalorder %s23, 3
      %p118 = scmp.ne.s32.totalorder %s113, %s115
      %p119 = scmp.eq.s32.totalorder %s23, 0
      %p120 = por %p118, %p119
      %p121 = scmp.ne.s32.totalorder %s113, %s115
      %p122 = scmp.eq.s32.totalorder %s28, 3
      %p123 = por %p121, %p122
      %p124 = scmp.ne.s32.totalorder %s115, %s116
      %p125 = scmp.eq.s32.totalorder %s28, 0
      %p126 = por %p124, %p125
      %p127 = scmp.ne.s32.totalorder %s115, %s116
      %p128 = scmp.eq.s32.totalorder %s29, 3
      %p129 = por %p127, %p128
      %p131 = scmp.ne.s32.totalorder %s116, %s130
      %p132 = scmp.eq.s32.totalorder %s29, 0
      %p133 = por %p131, %p132
      %s135 = sadd.s32 %s134, 1
      %p138 = scmp.eq.s32.totalorder %s23, 3
      %p139 = scmp.ne.s32.totalorder %s134, %s136
      %p140 = scmp.eq.s32.totalorder %s23, 0
      %p141 = por %p139, %p140
      %p142 = scmp.ne.s32.totalorder %s134, %s136
      %p143 = scmp.eq.s32.totalorder %s28, 3
      %p144 = por %p142, %p143
      %p145 = scmp.ne.s32.totalorder %s136, %s137
      %p146 = scmp.eq.s32.totalorder %s28, 0
      %p147 = por %p145, %p146
      %p148 = scmp.ne.s32.totalorder %s136, %s137
      %p149 = scmp.eq.s32.totalorder %s29, 3
      %p150 = por %p148, %p149
      %p152 = scmp.ne.s32.totalorder %s137, %s151
      %p153 = scmp.eq.s32.totalorder %s29, 0
      %p154 = por %p152, %p153
      %s156 = sadd.s32 %s155, 1
      %p159 = scmp.eq.s32.totalorder %s23, 3
      %p160 = scmp.ne.s32.totalorder %s155, %s157
      %p161 = scmp.eq.s32.totalorder %s23, 0
      %p162 = por %p160, %p161
      %p163 = scmp.ne.s32.totalorder %s155, %s157
      %p164 = scmp.eq.s32.totalorder %s28, 3
      %p165 = por %p163, %p164
      %p166 = scmp.ne.s32.totalorder %s157, %s158
      %p167 = scmp.eq.s32.totalorder %s28, 0
      %p168 = por %p166, %p167
      %p169 = scmp.ne.s32.totalorder %s157, %s158
      %p170 = scmp.eq.s32.totalorder %s29, 3
      %p171 = por %p169, %p170
      %p173 = scmp.ne.s32.totalorder %s158, %s172
      %p174 = scmp.eq.s32.totalorder %s29, 0
      %p175 = por %p173, %p174
      %s177 = sadd.s32 %s176, 1
      %p180 = scmp.eq.s32.totalorder %s23, 3
      %p181 = scmp.ne.s32.totalorder %s176, %s178
      %p182 = scmp.eq.s32.totalorder %s23, 0
      %p183 = por %p181, %p182
      %p184 = scmp.ne.s32.totalorder %s176, %s178
      %p185 = scmp.eq.s32.totalorder %s28, 3
      %p186 = por %p184, %p185
      %p187 = scmp.ne.s32.totalorder %s178, %s179
      %p188 = scmp.eq.s32.totalorder %s28, 0
      %p189 = por %p187, %p188
      %p190 = scmp.ne.s32.totalorder %s178, %s179
      %p191 = scmp.eq.s32.totalorder %s29, 3
      %p192 = por %p190, %p191
      %p194 = scmp.ne.s32.totalorder %s179, %s193
      %p195 = scmp.eq.s32.totalorder %s29, 0
      %p196 = por %p194, %p195
      %s198 = sadd.s32 %s197, 1
      %p201 = scmp.eq.s32.totalorder %s23, 3
      %p202 = scmp.ne.s32.totalorder %s197, %s199
      %p203 = scmp.eq.s32.totalorder %s23, 0
      %p204 = por %p202, %p203
      %p205 = scmp.ne.s32.totalorder %s197, %s199
      %p206 = scmp.eq.s32.totalorder %s28, 3
      %p207 = por %p205, %p206
      %p208 = scmp.ne.s32.totalorder %s199, %s200
      %p209 = scmp.eq.s32.totalorder %s28, 0
      %p210 = por %p208, %p209
      %p211 = scmp.ne.s32.totalorder %s199, %s200
      %p212 = scmp.eq.s32.totalorder %s29, 3
      %p213 = por %p211, %p212
      %p215 = scmp.ne.s32.totalorder %s200, %s214
      %p216 = scmp.eq.s32.totalorder %s29, 0
      %p217 = por %p215, %p216
      %s219 = sadd.s32 %s218, 1
      %p222 = scmp.eq.s32.totalorder %s23, 3
      %p223 = scmp.ne.s32.totalorder %s218, %s220
      %p224 = scmp.eq.s32.totalorder %s23, 0
      %p225 = por %p223, %p224
      %p226 = scmp.ne.s32.totalorder %s218, %s220
      %p227 = scmp.eq.s32.totalorder %s28, 3
      %p228 = por %p226, %p227
      %p229 = scmp.ne.s32.totalorder %s220, %s221
      %p230 = scmp.eq.s32.totalorder %s28, 0
      %p231 = por %p229, %p230
      %p232 = scmp.ne.s32.totalorder %s220, %s221
      %p233 = scmp.eq.s32.totalorder %s29, 3
      %p234 = por %p232, %p233
      %p236 = scmp.ne.s32.totalorder %s221, %s235
      %p237 = scmp.eq.s32.totalorder %s29, 0
      %p238 = por %p236, %p237
      %s240 = sadd.s32 %s239, 1
      %p243 = scmp.eq.s32.totalorder %s23, 3
      %p244 = scmp.ne.s32.totalorder %s239, %s241
      %p245 = scmp.eq.s32.totalorder %s23, 0
      %p246 = por %p244, %p245
      %p247 = scmp.ne.s32.totalorder %s239, %s241
      %p248 = scmp.eq.s32.totalorder %s28, 3
      %p249 = por %p247, %p248
      %p250 = scmp.ne.s32.totalorder %s241, %s242
      %p251 = scmp.eq.s32.totalorder %s28, 0
      %p252 = por %p250, %p251
      %p253 = scmp.ne.s32.totalorder %s241, %s242
      %p254 = scmp.eq.s32.totalorder %s29, 3
      %p255 = por %p253, %p254
      %p257 = scmp.ne.s32.totalorder %s242, %s256
      %p258 = scmp.eq.s32.totalorder %s29, 0
      %p259 = por %p257, %p258
      %s261 = sadd.s32 %s260, 1
      %p264 = scmp.eq.s32.totalorder %s23, 3
      %p265 = scmp.ne.s32.totalorder %s260, %s262
      %p266 = scmp.eq.s32.totalorder %s23, 0
      %p267 = por %p265, %p266
      %p268 = scmp.ne.s32.totalorder %s260, %s262
      %p269 = scmp.eq.s32.totalorder %s28, 3
      %p270 = por %p268, %p269
      %p271 = scmp.ne.s32.totalorder %s262, %s263
      %p272 = scmp.eq.s32.totalorder %s28, 0
      %p273 = por %p271, %p272
      %p274 = scmp.ne.s32.totalorder %s262, %s263
      %p275 = scmp.eq.s32.totalorder %s29, 3
      %p276 = por %p274, %p275
      %p278 = scmp.ne.s32.totalorder %s263, %s277
      %p279 = scmp.eq.s32.totalorder %s29, 0
      %p280 = por %p278, %p279
      %s282 = sadd.s32 %s281, 1
      %p285 = scmp.eq.s32.totalorder %s23, 3
      %p286 = scmp.ne.s32.totalorder %s281, %s283
      %p287 = scmp.eq.s32.totalorder %s23, 0
      %p288 = por %p286, %p287
      %p289 = scmp.ne.s32.totalorder %s281, %s283
      %p290 = scmp.eq.s32.totalorder %s28, 3
      %p291 = por %p289, %p290
      %p292 = scmp.ne.s32.totalorder %s283, %s284
      %p293 = scmp.eq.s32.totalorder %s28, 0
      %p294 = por %p292, %p293
      %p295 = scmp.ne.s32.totalorder %s283, %s284
      %p296 = scmp.eq.s32.totalorder %s29, 3
      %p297 = por %p295, %p296
      %p299 = scmp.ne.s32.totalorder %s284, %s298
      %p300 = scmp.eq.s32.totalorder %s29, 0
      %p301 = por %p299, %p300
      %s303 = sadd.s32 %s302, 1
      %p306 = scmp.eq.s32.totalorder %s23, 3
      %p307 = scmp.ne.s32.totalorder %s302, %s304
      %p308 = scmp.eq.s32.totalorder %s23, 0
      %p309 = por %p307, %p308
      %p310 = scmp.ne.s32.totalorder %s302, %s304
      %p311 = scmp.eq.s32.totalorder %s28, 3
      %p312 = por %p310, %p311
      %p313 = scmp.ne.s32.totalorder %s304, %s305
      %p314 = scmp.eq.s32.totalorder %s28, 0
      %p315 = por %p313, %p314
      %p316 = scmp.ne.s32.totalorder %s304, %s305
      %p317 = scmp.eq.s32.totalorder %s29, 3
      %p318 = por %p316, %p317
      %p320 = scmp.ne.s32.totalorder %s305, %s319
      %p321 = scmp.eq.s32.totalorder %s29, 0
      %p322 = por %p320, %p321
      %s324 = sadd.s32 %s323, 1
      %p327 = scmp.eq.s32.totalorder %s23, 3
      %p328 = scmp.ne.s32.totalorder %s323, %s325
      %p329 = scmp.eq.s32.totalorder %s23, 0
      %p330 = por %p328, %p329
      %p331 = scmp.ne.s32.totalorder %s323, %s325
      %p332 = scmp.eq.s32.totalorder %s28, 3
      %p333 = por %p331, %p332
      %p334 = scmp.ne.s32.totalorder %s325, %s326
      %p335 = scmp.eq.s32.totalorder %s28, 0
      %p336 = por %p334, %p335
      %p337 = scmp.ne.s32.totalorder %s325, %s326
      %p338 = scmp.eq.s32.totalorder %s29, 3
      %p339 = por %p337, %p338
      %p341 = scmp.ne.s32.totalorder %s326, %s340
      %p342 = scmp.eq.s32.totalorder %s29, 0
      %p343 = por %p341, %p342
      %s345 = sadd.s32 %s344, 1
      %p348 = scmp.eq.s32.totalorder %s23, 3
      %p349 = scmp.ne.s32.totalorder %s344, %s346
      %p350 = scmp.eq.s32.totalorder %s23, 0
      %p351 = por %p349, %p350
      %p352 = scmp.ne.s32.totalorder %s344, %s346
      %p353 = scmp.eq.s32.totalorder %s28, 3
      %p354 = por %p352, %p353
      %p355 = scmp.ne.s32.totalorder %s346, %s347
      %p356 = scmp.eq.s32.totalorder %s28, 0
      %p357 = por %p355, %p356
      %p358 = scmp.ne.s32.totalorder %s346, %s347
      %p359 = scmp.eq.s32.totalorder %s29, 3
      %p360 = por %p358, %p359
      %p362 = scmp.ne.s32.totalorder %s347, %s361
      %p363 = scmp.eq.s32.totalorder %s29, 0
      %p364 = por %p362, %p363
      %s365 = ssub.s32 %s30, %s42
      %p366 = scmp.eq.s32.totalorder %s365, 0
      %s368 = sadd.s32 %s367, 1
      %s369 = scalar_select %p366, %s367, %s368
      %p372 = pneg %p366
      %p373 = scmp.eq.s32.totalorder %s23, 3
      %p374 = por %p372, %p373
      %p375 = scmp.ne.s32.totalorder %s367, %s370
      %p376 = scmp.eq.s32.totalorder %s23, 0
      %p377 = por %p375, %p376
      %p378 = scmp.ne.s32.totalorder %s367, %s370
      %p379 = scmp.eq.s32.totalorder %s28, 3
      %p380 = por %p378, %p379
      %p381 = scmp.ne.s32.totalorder %s370, %s371
      %p382 = scmp.eq.s32.totalorder %s28, 0
      %p383 = por %p381, %p382
      %p384 = scmp.ne.s32.totalorder %s370, %s371
      %p385 = scmp.eq.s32.totalorder %s29, 3
      %p386 = por %p384, %p385
      %p388 = scmp.ne.s32.totalorder %s371, %s387
      %p389 = scmp.eq.s32.totalorder %s29, 0
      %p390 = por %p388, %p389
      %p391 = scmp.le.s32.totalorder 1, %s23
      %p392 = scmp.lt.s32.totalorder %s23, 5
      %p393 = pnand %p391, %p392
      %p394 = pneg %p393
      // Predicated region
      $region9: #{xin_multimodal_net_n15_forward.1} parent=5 // pred_check
        _
      $region10: #{xin_multimodal_net_n15_forward.1} parent=5 // pred_check_branch
        %396 = sbr.rel (%p393) target = $region12
      $region11: #{xin_multimodal_net_n15_forward.1} parent=5 // pred_region
        %s397 = ssub.s32 %s23, 1
        // Predicated region
        $region13: #{xin_multimodal_net_n15_forward.1} parent=11 // pred_check
          %p398 = pneg %p84
        $region14: #{xin_multimodal_net_n15_forward.1} parent=11 // pred_check_branch
          %400 = sbr.rel (%p398) target = $region16
        $region15: #{xin_multimodal_net_n15_forward.1} parent=11 // pred_region
          _
        $region16: #{xin_multimodal_net_n15_forward.1} parent=11 // pred_fallthru
          _
        // Predicated region
        $region17: #{xin_multimodal_net_n15_forward.1} parent=11 // pred_check
          %p401 = pneg %p105
        $region18: #{xin_multimodal_net_n15_forward.1} parent=11 // pred_check_branch
          %403 = sbr.rel (%p401) target = $region20
        $region19: #{xin_multimodal_net_n15_forward.1} parent=11 // pred_region
          _
        $region20: #{xin_multimodal_net_n15_forward.1} parent=11 // pred_fallthru
          _
        // Predicated region
        $region21: #{xin_multimodal_net_n15_forward.1} parent=11 // pred_check
          %p404 = pneg %p126
        $region22: #{xin_multimodal_net_n15_forward.1} parent=11 // pred_check_branch
          %406 = sbr.rel (%p404) target = $region24
        $region23: #{xin_multimodal_net_n15_forward.1} parent=11 // pred_region
          _
        $region24: #{xin_multimodal_net_n15_forward.1} parent=11 // pred_fallthru
          _
        // Predicated region
        $region25: #{xin_multimodal_net_n15_forward.1} parent=11 // pred_check
          %p407 = pneg %p147
        $region26: #{xin_multimodal_net_n15_forward.1} parent=11 // pred_check_branch
          %409 = sbr.rel (%p407) target = $region28
        $region27: #{xin_multimodal_net_n15_forward.1} parent=11 // pred_region
          _
        $region28: #{xin_multimodal_net_n15_forward.1} parent=11 // pred_fallthru
          _
        // Predicated region
        $region29: #{xin_multimodal_net_n15_forward.1} parent=11 // pred_check
          %p410 = pneg %p168
        $region30: #{xin_multimodal_net_n15_forward.1} parent=11 // pred_check_branch
          %412 = sbr.rel (%p410) target = $region32
        $region31: #{xin_multimodal_net_n15_forward.1} parent=11 // pred_region
          _
        $region32: #{xin_multimodal_net_n15_forward.1} parent=11 // pred_fallthru
          _
        // Predicated region
        $region33: #{xin_multimodal_net_n15_forward.1} parent=11 // pred_check
          %p413 = pneg %p189
        $region34: #{xin_multimodal_net_n15_forward.1} parent=11 // pred_check_branch
          %415 = sbr.rel (%p413) target = $region36
        $region35: #{xin_multimodal_net_n15_forward.1} parent=11 // pred_region
          _
        $region36: #{xin_multimodal_net_n15_forward.1} parent=11 // pred_fallthru
          _
        // Predicated region
        $region37: #{xin_multimodal_net_n15_forward.1} parent=11 // pred_check
          %p416 = pneg %p210
        $region38: #{xin_multimodal_net_n15_forward.1} parent=11 // pred_check_branch
          %418 = sbr.rel (%p416) target = $region40
        $region39: #{xin_multimodal_net_n15_forward.1} parent=11 // pred_region
          _
        $region40: #{xin_multimodal_net_n15_forward.1} parent=11 // pred_fallthru
          _
        // Predicated region
        $region41: #{xin_multimodal_net_n15_forward.1} parent=11 // pred_check
          %p419 = pneg %p231
        $region42: #{xin_multimodal_net_n15_forward.1} parent=11 // pred_check_branch
          %421 = sbr.rel (%p419) target = $region44
        $region43: #{xin_multimodal_net_n15_forward.1} parent=11 // pred_region
          _
        $region44: #{xin_multimodal_net_n15_forward.1} parent=11 // pred_fallthru
          _
        // Predicated region
        $region45: #{xin_multimodal_net_n15_forward.1} parent=11 // pred_check
          %p422 = pneg %p252
        $region46: #{xin_multimodal_net_n15_forward.1} parent=11 // pred_check_branch
          %424 = sbr.rel (%p422) target = $region48
        $region47: #{xin_multimodal_net_n15_forward.1} parent=11 // pred_region
          %s426 = ssub.s32 4096, 4096
          %427 = vsyncadd [#allocation5], %s426
          %s428 = sshll.u32 [#allocation4], 4
          %s429 = int_to_ptr.vmem [resolvable:$true] %s428
          %434 = dma.hbm_to_vmem [thread:$0]  %s9, 4096, %s429, [#allocation5], 128, 128, 8
        $region48: #{xin_multimodal_net_n15_forward.1} parent=11 // pred_fallthru
          _
        // Predicated region
        $region49: #{xin_multimodal_net_n15_forward.1} parent=11 // pred_check
          %p435 = pneg %p273
        $region50: #{xin_multimodal_net_n15_forward.1} parent=11 // pred_check_branch
          %437 = sbr.rel (%p435) target = $region52
        $region51: #{xin_multimodal_net_n15_forward.1} parent=11 // pred_region
          _
        $region52: #{xin_multimodal_net_n15_forward.1} parent=11 // pred_fallthru
          _
        // Predicated region
        $region53: #{xin_multimodal_net_n15_forward.1} parent=11 // pred_check
          %p438 = pneg %p294
        $region54: #{xin_multimodal_net_n15_forward.1} parent=11 // pred_check_branch
          %440 = sbr.rel (%p438) target = $region56
        $region55: #{xin_multimodal_net_n15_forward.1} parent=11 // pred_region
          _
        $region56: #{xin_multimodal_net_n15_forward.1} parent=11 // pred_fallthru
          _
        // Predicated region
        $region57: #{xin_multimodal_net_n15_forward.1} parent=11 // pred_check
          %p441 = pneg %p315
        $region58: #{xin_multimodal_net_n15_forward.1} parent=11 // pred_check_branch
          %443 = sbr.rel (%p441) target = $region60
        $region59: #{xin_multimodal_net_n15_forward.1} parent=11 // pred_region
          _
        $region60: #{xin_multimodal_net_n15_forward.1} parent=11 // pred_fallthru
          _
        // Predicated region
        $region61: #{xin_multimodal_net_n15_forward.1} parent=11 // pred_check
          %p444 = pneg %p336
        $region62: #{xin_multimodal_net_n15_forward.1} parent=11 // pred_check_branch
          %446 = sbr.rel (%p444) target = $region64
        $region63: #{xin_multimodal_net_n15_forward.1} parent=11 // pred_region
          %s448 = ssub.s32 4096, 4096
          %449 = vsyncadd [#allocation7], %s448
          %s450 = sshll.u32 [#allocation6], 4
          %s451 = int_to_ptr.vmem [resolvable:$true] %s450
          %456 = dma.hbm_to_vmem [thread:$0]  %s13, 4096, %s451, [#allocation7], 128, 128, 8
        $region64: #{xin_multimodal_net_n15_forward.1} parent=11 // pred_fallthru
          _
        // Predicated region
        $region65: #{xin_multimodal_net_n15_forward.1} parent=11 // pred_check
          %p457 = pneg %p357
        $region66: #{xin_multimodal_net_n15_forward.1} parent=11 // pred_check_branch
          %459 = sbr.rel (%p457) target = $region68
        $region67: #{xin_multimodal_net_n15_forward.1} parent=11 // pred_region
          _
        $region68: #{xin_multimodal_net_n15_forward.1} parent=11 // pred_fallthru
          _
      $region12: #{xin_multimodal_net_n15_forward.1} parent=5 // pred_fallthru
        _
      %p460 = scmp.lt.s32.totalorder %s23, 4
      // Predicated region
      $region69: #{xin_multimodal_net_n15_forward.1} parent=5 // pred_check
        %p461 = pneg %p460
      $region70: #{xin_multimodal_net_n15_forward.1} parent=5 // pred_check_branch
        %463 = sbr.rel (%p461) target = $region72
      $region71: #{xin_multimodal_net_n15_forward.1} parent=5 // pred_region
        // Predicated region
        $region73: #{xin_multimodal_net_n15_forward.1} parent=71 // pred_check
          %p464 = pneg %p57
        $region74: #{xin_multimodal_net_n15_forward.1} parent=71 // pred_check_branch
          %466 = sbr.rel (%p464) target = $region76
        $region75: #{xin_multimodal_net_n15_forward.1} parent=71 // pred_region
          %s467 = sand.u32 %s47, 1
          %s468 = sand.u32 %s47, 1
          %s469 = smul.addr %s468, 32
          %s470 = scalar_lea.vmem [#allocation3], %s469
          %s471 = smul.u32 4, %s31
          %s472 = smul.addr %s30, 16
          %s473 = sadd.s32 %s471, %s472
          %s474 = smul.addr %s473, 4
          %s475 = scalar_lea.vmem %s0, %s474
          // Predicated region
          $region77: #{xin_multimodal_net_n15_forward.1} parent=75 // pred_check
            _
          $region78: #{xin_multimodal_net_n15_forward.1} parent=75 // pred_check_branch
            %477 = sbr.rel (0) target = $region80
          $region79: #{xin_multimodal_net_n15_forward.1} parent=75 // pred_region
            // Predicated region
            $region81: #{xin_multimodal_net_n15_forward.1} parent=79 // pred_check
              _
            $region82: #{xin_multimodal_net_n15_forward.1} parent=79 // pred_check_branch
              %479 = sbr.rel (0) target = $region84
            $region83: #{xin_multimodal_net_n15_forward.1} parent=79 // pred_region
              loop: start=0, step=1, limit=1
              $region85: #{xin_multimodal_net_n15_forward.1} parent=83 // loop_pre_header
                _
              $region86: #{xin_multimodal_net_n15_forward.1} parent=83 // loop_header
                %s481 = sphi 0, %s485
                %p482 = scmp.ge.s32.totalorder %s481, 1
                %s486 = sphi %s475, %s475
                %s487 = sphi %s470, %s470
              $region87: #{xin_multimodal_net_n15_forward.1} parent=83 // loop_header_branch
                %484 = sbr.rel (%p482) target = $region91
              $region88: #{xin_multimodal_net_n15_forward.1} parent=83 // loop_body
                %v488 = vld [vmem:[%s486] sm:$0xff]
                %489 = vst [vmem:[%s487] sm:$0xff] %v488
                %v490 = vld [vmem:[%s486 + $0x8] sm:$0xff]
                %491 = vst [vmem:[%s487 + $0x8] sm:$0xff] %v490
                %v492 = vld [vmem:[%s486 + $0x20] sm:$0xff]
                %493 = vst [vmem:[%s487 + $0x10] sm:$0xff] %v492
                %v494 = vld [vmem:[%s486 + $0x28] sm:$0xff]
                %495 = vst [vmem:[%s487 + $0x18] sm:$0xff] %v494
              $region89: #{xin_multimodal_net_n15_forward.1} parent=83 // loop_footer
                %s485 = sadd.s32 1, %s481
              $region90: #{xin_multimodal_net_n15_forward.1} parent=83 // loop_footer_branch
                %480 = sbr.rel target = $region86
              $region91: #{xin_multimodal_net_n15_forward.1} parent=83 // loop_exit
                _
            $region84: #{xin_multimodal_net_n15_forward.1} parent=79 // pred_fallthru
              _
            // Predicated region
            $region92: #{xin_multimodal_net_n15_forward.1} parent=79 // pred_check
              _
            $region93: #{xin_multimodal_net_n15_forward.1} parent=79 // pred_check_branch
              %497 = sbr.rel target = $region95
            $region94: #{xin_multimodal_net_n15_forward.1} parent=79 // pred_region
              _
            $region95: #{xin_multimodal_net_n15_forward.1} parent=79 // pred_fallthru
              _
          $region80: #{xin_multimodal_net_n15_forward.1} parent=75 // pred_fallthru
            _
          %498 = vnop
        $region76: #{xin_multimodal_net_n15_forward.1} parent=71 // pred_fallthru
          _
      $region72: #{xin_multimodal_net_n15_forward.1} parent=5 // pred_fallthru
        _
      %p499 = scmp.le.s32.totalorder 1, %s23
      %p500 = scmp.lt.s32.totalorder %s23, 5
      %p501 = pnand %p499, %p500
      %p502 = pneg %p501
      // Predicated region
      $region96: #{xin_multimodal_net_n15_forward.1} parent=5 // pred_check
        _
      $region97: #{xin_multimodal_net_n15_forward.1} parent=5 // pred_check_branch
        %504 = sbr.rel (%p501) target = $region99
      $region98: #{xin_multimodal_net_n15_forward.1} parent=5 // pred_region
        %s505 = ssub.s32 %s23, 1
        %s506 = sand.u32 %s50, 1
        %s507 = sand.u32 %s50, 1
        %s508 = smul.addr %s507, 32
        %s509 = scalar_lea.vmem [#allocation3], %s508
        // Predicated region
        $region100: #{xin_multimodal_net_n15_forward.1} parent=98 // pred_check
          %p510 = pneg %p63
        $region101: #{xin_multimodal_net_n15_forward.1} parent=98 // pred_check_branch
          %512 = sbr.rel (%p510) target = $region103
        $region102: #{xin_multimodal_net_n15_forward.1} parent=98 // pred_region
          _
        $region103: #{xin_multimodal_net_n15_forward.1} parent=98 // pred_fallthru
          _
        // Predicated region
        $region104: #{xin_multimodal_net_n15_forward.1} parent=98 // pred_check
          %p513 = pneg %p252
        $region105: #{xin_multimodal_net_n15_forward.1} parent=98 // pred_check_branch
          %515 = sbr.rel (%p513) target = $region107
        $region106: #{xin_multimodal_net_n15_forward.1} parent=98 // pred_region
          %516 = dma.done [#allocation5], 4096
        $region107: #{xin_multimodal_net_n15_forward.1} parent=98 // pred_fallthru
          _
        // Predicated region
        $region108: #{xin_multimodal_net_n15_forward.1} parent=98 // pred_check
          %p517 = pneg %p336
        $region109: #{xin_multimodal_net_n15_forward.1} parent=98 // pred_check_branch
          %519 = sbr.rel (%p517) target = $region111
        $region110: #{xin_multimodal_net_n15_forward.1} parent=98 // pred_region
          %520 = dma.done [#allocation7], 4096
        $region111: #{xin_multimodal_net_n15_forward.1} parent=98 // pred_fallthru
          _
        %s521 = sand.u32 %s50, 1
        %s522 = sand.u32 %s50, 1
        %s523 = smul.addr %s522, 32
        %s524 = scalar_lea.vmem [#allocation3], %s523
        %p525 = pneg %p63
        %p526 = pneg %p60
        %p527 = pneg %p84
        %p528 = pneg %p81
        %p529 = pneg %p105
        %p530 = pneg %p102
        %p531 = pneg %p126
        %p532 = pneg %p123
        %p533 = pneg %p147
        %p534 = pneg %p144
        %p535 = pneg %p168
        %p536 = pneg %p165
        %p537 = pneg %p189
        %p538 = pneg %p186
        %p539 = pneg %p210
        %p540 = pneg %p207
        %p541 = pneg %p231
        %p542 = pneg %p228
        %p543 = pneg %p252
        %p544 = pneg %p249
        %p545 = pneg %p273
        %p546 = pneg %p270
        %p547 = pneg %p294
        %p548 = pneg %p291
        %p549 = pneg %p315
        %p550 = pneg %p312
        %p551 = pneg %p336
        %p552 = pneg %p333
        %p553 = pneg %p357
        %p554 = pneg %p354
        %p555 = pneg %p383
        %p556 = pneg %p380
        %p557 = scmp.lt.s32.totalorder %s32, 1
        %s558 = scalar_select %p557, %s32, 1
        %s559 = smul.addr %s558, 4
        %s560 = scalar_lea.vmem %s15, %s559
        %s561 = smul.u32 4, %s33
        %p562 = scmp.lt.s32.totalorder %s32, 1
        %s563 = scalar_select %p562, %s32, 1
        %s564 = smul.addr %s563, 4
        %s565 = scalar_lea.vmem %s15, %s564
        %p566 = scmp.eq.s32.totalorder %s33, 0
        // Predicated region
        $region112: #{xin_multimodal_net_n15_forward.1} parent=98 // pred_check
          %p567 = pneg %p566
        $region113: #{xin_multimodal_net_n15_forward.1} parent=98 // pred_check_branch
          %569 = sbr.rel (%p567) target = $region115
        $region114: #{xin_multimodal_net_n15_forward.1} parent=98 // pred_region
          %vm570 = vcmask 25600
          %571 = vst.msk [vmem:[#allocation2] sm:$0x3] %vm570, 0.0
        $region115: #{xin_multimodal_net_n15_forward.1} parent=98 // pred_fallthru
          _
        %v572 = vld [vmem:[%s509] sm:$0xff]
        %v573 = vld [vmem:[%s509 + $0x8] sm:$0xff]
        %v574 = vld [vmem:[%s509 + $0x10] sm:$0xff]
        %v575 = vld [vmem:[%s509 + $0x18] sm:$0xff]
        %v576 = vld [vmem:[#allocation2] sm:$0x3]
        %v581 = vcombine.high %v572, %v572
        %v582 = vcombine.high %v573, %v573
        %v583 = vcombine.high %v574, %v574
        %v584 = vcombine.high %v575, %v575
        %vm589 = vcmask 1043456
        %v590 = vsel %vm589, %v572, 0.0
        %v591 = vsel %vm589, %v581, 0.0
        %v592 = vadd.f32 %v590, %v591
        %v593 = vsel %vm589, %v573, 0.0
        %v594 = vadd.f32 %v592, %v593
        %v595 = vsel %vm589, %v582, 0.0
        %v596 = vadd.f32 %v594, %v595
        %597 = vadd.xlane.f32.xlu0 %v596
        %v598 = vpop.xlane.xlu0 %597
        %v599 = vsel %vm589, %v574, 0.0
        %v600 = vsel %vm589, %v583, 0.0
        %v601 = vadd.f32 %v599, %v600
        %v602 = vsel %vm589, %v575, 0.0
        %v603 = vadd.f32 %v601, %v602
        %v604 = vsel %vm589, %v584, 0.0
        %v605 = vadd.f32 %v603, %v604
        %606 = vadd.xlane.f32.xlu0 %v605
        %v607 = vpop.xlane.xlu0 %606
        %v610 = vlaneseq
        %v611 = vand.u32 %v610, 127
        %v612 = vlaneseq
        %v613 = vshrl.u32 %v612, 7
        %v614 = vsub.s32 %v611, %v613
        %v615 = vrot.slane %v598, %v614
        %v616 = vlaneseq
        %v617 = vshrl.u32 %v616, 7
        %v618 = vsub.s32 %v611, %v617
        %v619 = vrot.slane %v607, %v618
        %vm620 = vcmask 1041409
        %v621 = vsel %vm620, %v619, %v615
        %v623 = vadd.f32 %v576, %v621
        %vm624 = vcmask 25600
        %625 = vst.msk [vmem:[#allocation2] sm:$0x3] %vm624, %v623
        %p626 = scmp.eq.s32.totalorder %s33, 1
        // Predicated region
        $region116: #{xin_multimodal_net_n15_forward.1} parent=98 // pred_check
          %p627 = pneg %p626
        $region117: #{xin_multimodal_net_n15_forward.1} parent=98 // pred_check_branch
          %629 = sbr.rel (%p627) target = $region119
        $region118: #{xin_multimodal_net_n15_forward.1} parent=98 // pred_region
          %v630 = vld [vmem:[#allocation2] sm:$0x3]
          %v631 = vld [vmem:[%s1] sm:$0xff]
          %v632 = vld [vmem:[%s1 + $0x8] sm:$0xff]
          %v633 = vld [vmem:[%s1 + $0x10] sm:$0xff]
          %v634 = vld [vmem:[%s2] sm:$0x3f]
          %v636 = vlaneseq
          %v637 = vshrl.u32 %v636, 7
          %v638 = vsub.s32 0, %v637
          %v639 = vrot.slane %v634, %v638
          %v640 = vlaneseq
          %v641 = vshrl.u32 %v640, 7
          %v642 = vsub.s32 1, %v641
          %v643 = vrot.slane %v634, %v642
          %v644 = vlaneseq
          %v645 = vshrl.u32 %v644, 7
          %v646 = vsub.s32 2, %v645
          %v647 = vrot.slane %v634, %v646
          %v648 = vlaneseq
          %v649 = vshrl.u32 %v648, 7
          %v650 = vsub.s32 3, %v649
          %v651 = vrot.slane %v634, %v650
          %v652 = vlaneseq
          %v653 = vshrl.u32 %v652, 7
          %v654 = vsub.s32 4, %v653
          %v655 = vrot.slane %v634, %v654
          %v656 = vlaneseq
          %v657 = vshrl.u32 %v656, 7
          %v658 = vsub.s32 5, %v657
          %v659 = vrot.slane %v634, %v658
          %v669 = vcombine.high %v631, %v631
          %v670 = vcombine.high %v632, %v632
          %v671 = vcombine.high %v633, %v633
          %vm672 = vcmask 31744
          %v674 = vsel %vm672, %v630, 0
          %v676 = vsel %vm589, %v631, 0
          %v678 = vsel %vm589, %v669, 0
          %v680 = vsel %vm589, %v632, 0
          %v682 = vsel %vm589, %v670, 0
          %v684 = vsel %vm589, %v633, 0
          %v686 = vsel %vm589, %v671, 0
          %688 = vmatprep.subr.mxu0 %v678
          %689 = vmatpush1.msra.mxu0 %v676
          %690 = vmatprep.subr.mxu0 0.0
          %691 = vmatpush1.msra.mxu0 0.0
          %692 = vmatprep.subr.mxu0 0.0
          %693 = vmatpush1.msra.mxu0 0.0
          %694 = vmatprep.subr.mxu0 0.0
          %695 = vmatpush1.msra.mxu0 0.0
          %696 = vmatprep.subr.mxu0 0.0
          %697 = vmatpush1.msra.mxu0 0.0
          %698 = vmatprep.subr.mxu0 0.0
          %699 = vmatpush1.msra.mxu0 0.0
          %700 = vmatprep.subr.mxu0 0.0
          %701 = vmatpush1.msra.mxu0 0.0
          %702 = vmatprep.subr.mxu0 0.0
          %703 = vmatpush1.msra.mxu0 0.0
          %704 = vmatprep.subr.mxu0 0.0
          %705 = vmatpush1.msra.mxu0 0.0
          %706 = vmatprep.subr.mxu0 0.0
          %707 = vmatpush1.msra.mxu0 0.0
          %708 = vmatprep.subr.mxu0 0.0
          %709 = vmatpush1.msra.mxu0 0.0
          %710 = vmatprep.subr.mxu0 0.0
          %711 = vmatpush1.msra.mxu0 0.0
          %712 = vmatprep.subr.mxu0 0.0
          %713 = vmatpush1.msra.mxu0 0.0
          %714 = vmatprep.subr.mxu0 0.0
          %715 = vmatpush1.msra.mxu0 0.0
          %716 = vmatprep.subr.mxu0 0.0
          %717 = vmatpush1.msra.mxu0 0.0
          %718 = vmatprep.subr.mxu0 0.0
          %719 = vmatpush1.msra.mxu0 0.0
          %720 = vmatprep.subr.mxu0 0.0
          %721 = vmatpush1.msra.mxu0 0.0
          %722 = vmatprep.subr.mxu0 0.0
          %723 = vmatpush1.msra.mxu0 0.0
          %724 = vmatprep.subr.mxu0 0.0
          %725 = vmatpush1.msra.mxu0 0.0
          %726 = vmatprep.subr.mxu0 0.0
          %727 = vmatpush1.msra.mxu0 0.0
          %728 = vmatprep.subr.mxu0 0.0
          %729 = vmatpush1.msra.mxu0 0.0
          %730 = vmatprep.subr.mxu0 0.0
          %731 = vmatpush1.msra.mxu0 0.0
          %732 = vmatprep.subr.mxu0 0.0
          %733 = vmatpush1.msra.mxu0 0.0
          %734 = vmatprep.subr.mxu0 0.0
          %735 = vmatpush1.msra.mxu0 0.0
          %736 = vmatprep.subr.mxu0 0.0
          %737 = vmatpush1.msra.mxu0 0.0
          %738 = vmatprep.subr.mxu0 0.0
          %739 = vmatpush1.msra.mxu0 0.0
          %740 = vmatprep.subr.mxu0 0.0
          %741 = vmatpush1.msra.mxu0 0.0
          %742 = vmatprep.subr.mxu0 0.0
          %743 = vmatpush1.msra.mxu0 0.0
          %744 = vmatprep.subr.mxu0 0.0
          %745 = vmatpush1.msra.mxu0 0.0
          %746 = vmatprep.subr.mxu0 0.0
          %747 = vmatpush1.msra.mxu0 0.0
          %748 = vmatprep.subr.mxu0 0.0
          %749 = vmatpush1.msra.mxu0 0.0
          %750 = vmatprep.subr.mxu0 0.0
          %751 = vmatpush1.msra.mxu0 0.0
          %752 = vmatprep.mubr.f32.mxu0 0.0
          %753 = vmatmul.mubr.f32.gmra.mrb[0].mxu0 %v674
          %v754 = vpop.f32.mrb[0].mxu0
          %v755 = vadd.f32 %v639, %v754
          %v756 = vpop.f32.mrb[0].mxu0
          %v757 = vadd.f32 %v643, %v756
          %758 = vdwg.mxu0
          %759 = vmatprep.subr.mxu0 %v682
          %760 = vmatpush1.msra.mxu0 %v680
          %761 = vmatprep.subr.mxu0 0.0
          %762 = vmatpush1.msra.mxu0 0.0
          %763 = vmatprep.subr.mxu0 0.0
          %764 = vmatpush1.msra.mxu0 0.0
          %765 = vmatprep.subr.mxu0 0.0
          %766 = vmatpush1.msra.mxu0 0.0
          %767 = vmatprep.subr.mxu0 0.0
          %768 = vmatpush1.msra.mxu0 0.0
          %769 = vmatprep.subr.mxu0 0.0
          %770 = vmatpush1.msra.mxu0 0.0
          %771 = vmatprep.subr.mxu0 0.0
          %772 = vmatpush1.msra.mxu0 0.0
          %773 = vmatprep.subr.mxu0 0.0
          %774 = vmatpush1.msra.mxu0 0.0
          %775 = vmatprep.subr.mxu0 0.0
          %776 = vmatpush1.msra.mxu0 0.0
          %777 = vmatprep.subr.mxu0 0.0
          %778 = vmatpush1.msra.mxu0 0.0
          %779 = vmatprep.subr.mxu0 0.0
          %780 = vmatpush1.msra.mxu0 0.0
          %781 = vmatprep.subr.mxu0 0.0
          %782 = vmatpush1.msra.mxu0 0.0
          %783 = vmatprep.subr.mxu0 0.0
          %784 = vmatpush1.msra.mxu0 0.0
          %785 = vmatprep.subr.mxu0 0.0
          %786 = vmatpush1.msra.mxu0 0.0
          %787 = vmatprep.subr.mxu0 0.0
          %788 = vmatpush1.msra.mxu0 0.0
          %789 = vmatprep.subr.mxu0 0.0
          %790 = vmatpush1.msra.mxu0 0.0
          %791 = vmatprep.subr.mxu0 0.0
          %792 = vmatpush1.msra.mxu0 0.0
          %793 = vmatprep.subr.mxu0 0.0
          %794 = vmatpush1.msra.mxu0 0.0
          %795 = vmatprep.subr.mxu0 0.0
          %796 = vmatpush1.msra.mxu0 0.0
          %797 = vmatprep.subr.mxu0 0.0
          %798 = vmatpush1.msra.mxu0 0.0
          %799 = vmatprep.subr.mxu0 0.0
          %800 = vmatpush1.msra.mxu0 0.0
          %801 = vmatprep.subr.mxu0 0.0
          %802 = vmatpush1.msra.mxu0 0.0
          %803 = vmatprep.subr.mxu0 0.0
          %804 = vmatpush1.msra.mxu0 0.0
          %805 = vmatprep.subr.mxu0 0.0
          %806 = vmatpush1.msra.mxu0 0.0
          %807 = vmatprep.subr.mxu0 0.0
          %808 = vmatpush1.msra.mxu0 0.0
          %809 = vmatprep.subr.mxu0 0.0
          %810 = vmatpush1.msra.mxu0 0.0
          %811 = vmatprep.subr.mxu0 0.0
          %812 = vmatpush1.msra.mxu0 0.0
          %813 = vmatprep.subr.mxu0 0.0
          %814 = vmatpush1.msra.mxu0 0.0
          %815 = vmatprep.subr.mxu0 0.0
          %816 = vmatpush1.msra.mxu0 0.0
          %817 = vmatprep.subr.mxu0 0.0
          %818 = vmatpush1.msra.mxu0 0.0
          %819 = vmatprep.subr.mxu0 0.0
          %820 = vmatpush1.msra.mxu0 0.0
          %821 = vmatprep.subr.mxu0 0.0
          %822 = vmatpush1.msra.mxu0 0.0
          %823 = vmatprep.mubr.f32.mxu0 0.0
          %824 = vmatmul.mubr.f32.gmra.mrb[0].mxu0 %v674
          %v825 = vpop.f32.mrb[0].mxu0
          %v826 = vadd.f32 %v647, %v825
          %v827 = vpop.f32.mrb[0].mxu0
          %v828 = vadd.f32 %v651, %v827
          %829 = vdwg.mxu0
          %830 = vmatprep.subr.mxu0 %v686
          %831 = vmatpush1.msra.mxu0 %v684
          %832 = vmatprep.subr.mxu0 0.0
          %833 = vmatpush1.msra.mxu0 0.0
          %834 = vmatprep.subr.mxu0 0.0
          %835 = vmatpush1.msra.mxu0 0.0
          %836 = vmatprep.subr.mxu0 0.0
          %837 = vmatpush1.msra.mxu0 0.0
          %838 = vmatprep.subr.mxu0 0.0
          %839 = vmatpush1.msra.mxu0 0.0
          %840 = vmatprep.subr.mxu0 0.0
          %841 = vmatpush1.msra.mxu0 0.0
          %842 = vmatprep.subr.mxu0 0.0
          %843 = vmatpush1.msra.mxu0 0.0
          %844 = vmatprep.subr.mxu0 0.0
          %845 = vmatpush1.msra.mxu0 0.0
          %846 = vmatprep.subr.mxu0 0.0
          %847 = vmatpush1.msra.mxu0 0.0
          %848 = vmatprep.subr.mxu0 0.0
          %849 = vmatpush1.msra.mxu0 0.0
          %850 = vmatprep.subr.mxu0 0.0
          %851 = vmatpush1.msra.mxu0 0.0
          %852 = vmatprep.subr.mxu0 0.0
          %853 = vmatpush1.msra.mxu0 0.0
          %854 = vmatprep.subr.mxu0 0.0
          %855 = vmatpush1.msra.mxu0 0.0
          %856 = vmatprep.subr.mxu0 0.0
          %857 = vmatpush1.msra.mxu0 0.0
          %858 = vmatprep.subr.mxu0 0.0
          %859 = vmatpush1.msra.mxu0 0.0
          %860 = vmatprep.subr.mxu0 0.0
          %861 = vmatpush1.msra.mxu0 0.0
          %862 = vmatprep.subr.mxu0 0.0
          %863 = vmatpush1.msra.mxu0 0.0
          %864 = vmatprep.subr.mxu0 0.0
          %865 = vmatpush1.msra.mxu0 0.0
          %866 = vmatprep.subr.mxu0 0.0
          %867 = vmatpush1.msra.mxu0 0.0
          %868 = vmatprep.subr.mxu0 0.0
          %869 = vmatpush1.msra.mxu0 0.0
          %870 = vmatprep.subr.mxu0 0.0
          %871 = vmatpush1.msra.mxu0 0.0
          %872 = vmatprep.subr.mxu0 0.0
          %873 = vmatpush1.msra.mxu0 0.0
          %874 = vmatprep.subr.mxu0 0.0
          %875 = vmatpush1.msra.mxu0 0.0
          %876 = vmatprep.subr.mxu0 0.0
          %877 = vmatpush1.msra.mxu0 0.0
          %878 = vmatprep.subr.mxu0 0.0
          %879 = vmatpush1.msra.mxu0 0.0
          %880 = vmatprep.subr.mxu0 0.0
          %881 = vmatpush1.msra.mxu0 0.0
          %882 = vmatprep.subr.mxu0 0.0
          %883 = vmatpush1.msra.mxu0 0.0
          %884 = vmatprep.subr.mxu0 0.0
          %885 = vmatpush1.msra.mxu0 0.0
          %886 = vmatprep.subr.mxu0 0.0
          %887 = vmatpush1.msra.mxu0 0.0
          %888 = vmatprep.subr.mxu0 0.0
          %889 = vmatpush1.msra.mxu0 0.0
          %890 = vmatprep.subr.mxu0 0.0
          %891 = vmatpush1.msra.mxu0 0.0
          %892 = vmatprep.subr.mxu0 0.0
          %893 = vmatpush1.msra.mxu0 0.0
          %894 = vmatprep.mubr.f32.mxu0 0.0
          %895 = vmatmul.mubr.f32.gmra.mrb[0].mxu0 %v674
          %v896 = vpop.f32.mrb[0].mxu0
          %v897 = vadd.f32 %v655, %v896
          %v898 = vpop.f32.mrb[0].mxu0
          %v899 = vadd.f32 %v659, %v898
          %900 = vdwg.mxu0
          %v901 = vpack.c.bf16 %v755, %v755
          %v902 = vpack.c.bf16 %v757, %v757
          %v903 = vpack.c.bf16 %v826, %v826
          %v904 = vpack.c.bf16 %v828, %v828
          %v905 = vpack.c.bf16 %v897, %v897
          %v906 = vpack.c.bf16 %v899, %v899
          %v907 = vld [vmem:[%s3] sm:$0xff]
          %v908 = vld [vmem:[%s3 + $0x8] sm:$0xff]
          %v909 = vld [vmem:[%s3 + $0x10] sm:$0xff]
          %v910 = vld [vmem:[%s3 + $0x18] sm:$0xff]
          %v911 = vld [vmem:[%s3 + $0x20] sm:$0xff]
          %v912 = vld [vmem:[%s3 + $0x28] sm:$0xff]
          %v913 = vld [vmem:[%s3 + $0x30] sm:$0xff]
          %v914 = vld [vmem:[%s3 + $0x38] sm:$0xff]
          %v915 = vld [vmem:[%s3 + $0x40] sm:$0xff]
          %v916 = vld [vmem:[%s3 + $0x48] sm:$0xff]
          %v917 = vld [vmem:[%s3 + $0x50] sm:$0xff]
          %v918 = vld [vmem:[%s3 + $0x58] sm:$0xff]
          %v919 = vld [vmem:[%s3 + $0x60] sm:$0xff]
          %v920 = vld [vmem:[%s3 + $0x68] sm:$0xff]
          %v921 = vld [vmem:[%s3 + $0x70] sm:$0xff]
          %v922 = vld [vmem:[%s3 + $0x78] sm:$0xff]
          %v923 = vld [vmem:[%s3 + $0x80] sm:$0xff]
          %v924 = vld [vmem:[%s3 + $0x88] sm:$0xff]
          %v925 = vld [vmem:[%s3 + $0x90] sm:$0xff]
          %v926 = vld [vmem:[%s3 + $0x98] sm:$0xff]
          %v927 = vld [vmem:[%s3 + $0xa0] sm:$0xff]
          %v928 = vld [vmem:[%s3 + $0xa8] sm:$0xff]
          %v929 = vld [vmem:[%s3 + $0xb0] sm:$0xff]
          %v930 = vld [vmem:[%s3 + $0xb8] sm:$0xff]
          %v931 = vld [vmem:[%s3 + $0xc0] sm:$0xff]
          %v932 = vld [vmem:[%s3 + $0xc8] sm:$0xff]
          %v933 = vld [vmem:[%s3 + $0xd0] sm:$0xff]
          %v934 = vld [vmem:[%s3 + $0xd8] sm:$0xff]
          %v935 = vld [vmem:[%s3 + $0xe0] sm:$0xff]
          %v936 = vld [vmem:[%s3 + $0xe8] sm:$0xff]
          %v937 = vld [vmem:[%s3 + $0xf0] sm:$0xff]
          %v938 = vld [vmem:[%s3 + $0xf8] sm:$0xff]
          %v939 = vld [vmem:[%s3 + $0x100] sm:$0xff]
          %v940 = vld [vmem:[%s3 + $0x108] sm:$0xff]
          %v941 = vld [vmem:[%s3 + $0x110] sm:$0xff]
          %v942 = vld [vmem:[%s3 + $0x118] sm:$0xff]
          %v943 = vld [vmem:[%s3 + $0x120] sm:$0xff]
          %v944 = vld [vmem:[%s3 + $0x128] sm:$0xff]
          %v945 = vld [vmem:[%s3 + $0x130] sm:$0xff]
          %v946 = vld [vmem:[%s3 + $0x138] sm:$0xff]
          %v947 = vld [vmem:[%s3 + $0x140] sm:$0xff]
          %v948 = vld [vmem:[%s3 + $0x148] sm:$0xff]
          %v949 = vld [vmem:[%s3 + $0x150] sm:$0xff]
          %v950 = vld [vmem:[%s3 + $0x158] sm:$0xff]
          %v951 = vld [vmem:[%s3 + $0x160] sm:$0xff]
          %v952 = vld [vmem:[%s3 + $0x168] sm:$0xff]
          %v953 = vld [vmem:[%s3 + $0x170] sm:$0xff]
          %v954 = vld [vmem:[%s3 + $0x178] sm:$0xff]
          %v955 = vld [vmem:[%s3 + $0x180] sm:$0xff]
          %v956 = vld [vmem:[%s3 + $0x188] sm:$0xff]
          %v957 = vld [vmem:[%s3 + $0x190] sm:$0xff]
          %v958 = vld [vmem:[%s3 + $0x198] sm:$0xff]
          %v959 = vld [vmem:[%s3 + $0x1a0] sm:$0xff]
          %v960 = vld [vmem:[%s3 + $0x1a8] sm:$0xff]
          %v961 = vld [vmem:[%s3 + $0x1b0] sm:$0xff]
          %v962 = vld [vmem:[%s3 + $0x1b8] sm:$0xff]
          %v963 = vld [vmem:[%s3 + $0x1c0] sm:$0xff]
          %v964 = vld [vmem:[%s3 + $0x1c8] sm:$0xff]
          %v965 = vld [vmem:[%s3 + $0x1d0] sm:$0xff]
          %v966 = vld [vmem:[%s3 + $0x1d8] sm:$0xff]
          %v967 = vld [vmem:[%s3 + $0x1e0] sm:$0xff]
          %v968 = vld [vmem:[%s3 + $0x1e8] sm:$0xff]
          %v969 = vld [vmem:[%s3 + $0x1f0] sm:$0xff]
          %v970 = vld [vmem:[%s3 + $0x1f8] sm:$0xff]
          %v971 = vld [vmem:[%s3 + $0x200] sm:$0xff]
          %v972 = vld [vmem:[%s3 + $0x208] sm:$0xff]
          %v973 = vld [vmem:[%s3 + $0x210] sm:$0xff]
          %v974 = vld [vmem:[%s3 + $0x218] sm:$0xff]
          %v975 = vld [vmem:[%s3 + $0x220] sm:$0xff]
          %v976 = vld [vmem:[%s3 + $0x228] sm:$0xff]
          %v977 = vld [vmem:[%s3 + $0x230] sm:$0xff]
          %v978 = vld [vmem:[%s3 + $0x238] sm:$0xff]
          %v979 = vld [vmem:[%s3 + $0x240] sm:$0xff]
          %v980 = vld [vmem:[%s3 + $0x248] sm:$0xff]
          %v981 = vld [vmem:[%s3 + $0x250] sm:$0xff]
          %v982 = vld [vmem:[%s3 + $0x258] sm:$0xff]
          %v983 = vld [vmem:[%s3 + $0x260] sm:$0xff]
          %v984 = vld [vmem:[%s3 + $0x268] sm:$0xff]
          %v985 = vld [vmem:[%s3 + $0x270] sm:$0xff]
          %v986 = vld [vmem:[%s3 + $0x278] sm:$0xff]
          %v987 = vld [vmem:[%s3 + $0x280] sm:$0xff]
          %v988 = vld [vmem:[%s3 + $0x288] sm:$0xff]
          %v989 = vld [vmem:[%s3 + $0x290] sm:$0xff]
          %v990 = vld [vmem:[%s3 + $0x298] sm:$0xff]
          %v991 = vld [vmem:[%s3 + $0x2a0] sm:$0xff]
          %v992 = vld [vmem:[%s3 + $0x2a8] sm:$0xff]
          %v993 = vld [vmem:[%s3 + $0x2b0] sm:$0xff]
          %v994 = vld [vmem:[%s3 + $0x2b8] sm:$0xff]
          %v995 = vld [vmem:[%s3 + $0x2c0] sm:$0xff]
          %v996 = vld [vmem:[%s3 + $0x2c8] sm:$0xff]
          %v997 = vld [vmem:[%s3 + $0x2d0] sm:$0xff]
          %v998 = vld [vmem:[%s3 + $0x2d8] sm:$0xff]
          %v999 = vld [vmem:[%s3 + $0x2e0] sm:$0xff]
          %v1000 = vld [vmem:[%s3 + $0x2e8] sm:$0xff]
          %v1001 = vld [vmem:[%s3 + $0x2f0] sm:$0xff]
          %v1002 = vld [vmem:[%s3 + $0x2f8] sm:$0xff]
          %v1003 = vld [vmem:[%s4] sm:$0x3]
          %v1005 = vlaneseq
          %v1006 = vshrl.u32 %v1005, 7
          %v1007 = vsub.s32 0, %v1006
          %v1008 = vrot.slane %v1003, %v1007
          %v1009 = vlaneseq
          %v1010 = vshrl.u32 %v1009, 7
          %v1011 = vsub.s32 1, %v1010
          %v1012 = vrot.slane %v1003, %v1011
          %v1111 = vunpack.c.l.b16 %v907
          %v1112 = vunpack.c.h.b16 %v907
          %v1113 = vunpack.c.l.b16 %v908
          %v1114 = vunpack.c.h.b16 %v908
          %v1115 = vunpack.c.l.b16 %v909
          %v1116 = vunpack.c.h.b16 %v909
          %v1117 = vunpack.c.l.b16 %v910
          %v1118 = vunpack.c.h.b16 %v910
          %v1119 = vunpack.c.l.b16 %v911
          %v1120 = vunpack.c.h.b16 %v911
          %v1121 = vunpack.c.l.b16 %v912
          %v1122 = vunpack.c.h.b16 %v912
          %v1123 = vunpack.c.l.b16 %v913
          %v1124 = vunpack.c.h.b16 %v913
          %v1125 = vunpack.c.l.b16 %v914
          %v1126 = vunpack.c.h.b16 %v914
          %v1127 = vunpack.c.l.b16 %v915
          %v1128 = vunpack.c.h.b16 %v915
          %v1129 = vunpack.c.l.b16 %v916
          %v1130 = vunpack.c.h.b16 %v916
          %v1131 = vunpack.c.l.b16 %v917
          %v1132 = vunpack.c.h.b16 %v917
          %v1133 = vunpack.c.l.b16 %v918
          %v1134 = vunpack.c.h.b16 %v918
          %v1135 = vunpack.c.l.b16 %v919
          %v1136 = vunpack.c.h.b16 %v919
          %v1137 = vunpack.c.l.b16 %v920
          %v1138 = vunpack.c.h.b16 %v920
          %v1139 = vunpack.c.l.b16 %v921
          %v1140 = vunpack.c.h.b16 %v921
          %v1141 = vunpack.c.l.b16 %v922
          %v1142 = vunpack.c.h.b16 %v922
          %v1143 = vunpack.c.l.b16 %v923
          %v1144 = vunpack.c.h.b16 %v923
          %v1145 = vunpack.c.l.b16 %v924
          %v1146 = vunpack.c.h.b16 %v924
          %v1147 = vunpack.c.l.b16 %v925
          %v1148 = vunpack.c.h.b16 %v925
          %v1149 = vunpack.c.l.b16 %v926
          %v1150 = vunpack.c.h.b16 %v926
          %v1151 = vunpack.c.l.b16 %v927
          %v1152 = vunpack.c.h.b16 %v927
          %v1153 = vunpack.c.l.b16 %v928
          %v1154 = vunpack.c.h.b16 %v928
          %v1155 = vunpack.c.l.b16 %v929
          %v1156 = vunpack.c.h.b16 %v929
          %v1157 = vunpack.c.l.b16 %v930
          %v1158 = vunpack.c.h.b16 %v930
          %v1159 = vunpack.c.l.b16 %v931
          %v1160 = vunpack.c.h.b16 %v931
          %v1161 = vunpack.c.l.b16 %v932
          %v1162 = vunpack.c.h.b16 %v932
          %v1163 = vunpack.c.l.b16 %v933
          %v1164 = vunpack.c.h.b16 %v933
          %v1165 = vunpack.c.l.b16 %v934
          %v1166 = vunpack.c.h.b16 %v934
          %v1167 = vunpack.c.l.b16 %v935
          %v1168 = vunpack.c.h.b16 %v935
          %v1169 = vunpack.c.l.b16 %v936
          %v1170 = vunpack.c.h.b16 %v936
          %v1171 = vunpack.c.l.b16 %v937
          %v1172 = vunpack.c.h.b16 %v937
          %v1173 = vunpack.c.l.b16 %v938
          %v1174 = vunpack.c.h.b16 %v938
          %v1175 = vunpack.c.l.b16 %v939
          %v1176 = vunpack.c.h.b16 %v939
          %v1177 = vunpack.c.l.b16 %v940
          %v1178 = vunpack.c.h.b16 %v940
          %v1179 = vunpack.c.l.b16 %v941
          %v1180 = vunpack.c.h.b16 %v941
          %v1181 = vunpack.c.l.b16 %v942
          %v1182 = vunpack.c.h.b16 %v942
          %v1183 = vunpack.c.l.b16 %v943
          %v1184 = vunpack.c.h.b16 %v943
          %v1185 = vunpack.c.l.b16 %v944
          %v1186 = vunpack.c.h.b16 %v944
          %v1187 = vunpack.c.l.b16 %v945
          %v1188 = vunpack.c.h.b16 %v945
          %v1189 = vunpack.c.l.b16 %v946
          %v1190 = vunpack.c.h.b16 %v946
          %v1191 = vunpack.c.l.b16 %v947
          %v1192 = vunpack.c.h.b16 %v947
          %v1193 = vunpack.c.l.b16 %v948
          %v1194 = vunpack.c.h.b16 %v948
          %v1195 = vunpack.c.l.b16 %v949
          %v1196 = vunpack.c.h.b16 %v949
          %v1197 = vunpack.c.l.b16 %v950
          %v1198 = vunpack.c.h.b16 %v950
          %v1199 = vunpack.c.l.b16 %v951
          %v1200 = vunpack.c.h.b16 %v951
          %v1201 = vunpack.c.l.b16 %v952
          %v1202 = vunpack.c.h.b16 %v952
          %v1203 = vunpack.c.l.b16 %v953
          %v1204 = vunpack.c.h.b16 %v953
          %v1205 = vunpack.c.l.b16 %v954
          %v1206 = vunpack.c.h.b16 %v954
          %v1207 = vunpack.c.l.b16 %v955
          %v1208 = vunpack.c.h.b16 %v955
          %v1209 = vunpack.c.l.b16 %v956
          %v1210 = vunpack.c.h.b16 %v956
          %v1211 = vunpack.c.l.b16 %v957
          %v1212 = vunpack.c.h.b16 %v957
          %v1213 = vunpack.c.l.b16 %v958
          %v1214 = vunpack.c.h.b16 %v958
          %v1215 = vunpack.c.l.b16 %v959
          %v1216 = vunpack.c.h.b16 %v959
          %v1217 = vunpack.c.l.b16 %v960
          %v1218 = vunpack.c.h.b16 %v960
          %v1219 = vunpack.c.l.b16 %v961
          %v1220 = vunpack.c.h.b16 %v961
          %v1221 = vunpack.c.l.b16 %v962
          %v1222 = vunpack.c.h.b16 %v962
          %v1223 = vunpack.c.l.b16 %v963
          %v1224 = vunpack.c.h.b16 %v963
          %v1225 = vunpack.c.l.b16 %v964
          %v1226 = vunpack.c.h.b16 %v964
          %v1227 = vunpack.c.l.b16 %v965
          %v1228 = vunpack.c.h.b16 %v965
          %v1229 = vunpack.c.l.b16 %v966
          %v1230 = vunpack.c.h.b16 %v966
          %v1231 = vunpack.c.l.b16 %v967
          %v1232 = vunpack.c.h.b16 %v967
          %v1233 = vunpack.c.l.b16 %v968
          %v1234 = vunpack.c.h.b16 %v968
          %v1235 = vunpack.c.l.b16 %v969
          %v1236 = vunpack.c.h.b16 %v969
          %v1237 = vunpack.c.l.b16 %v970
          %v1238 = vunpack.c.h.b16 %v970
          %v1239 = vunpack.c.l.b16 %v971
          %v1240 = vunpack.c.h.b16 %v971
          %v1241 = vunpack.c.l.b16 %v972
          %v1242 = vunpack.c.h.b16 %v972
          %v1243 = vunpack.c.l.b16 %v973
          %v1244 = vunpack.c.h.b16 %v973
          %v1245 = vunpack.c.l.b16 %v974
          %v1246 = vunpack.c.h.b16 %v974
          %v1247 = vunpack.c.l.b16 %v975
          %v1248 = vunpack.c.h.b16 %v975
          %v1249 = vunpack.c.l.b16 %v976
          %v1250 = vunpack.c.h.b16 %v976
          %v1251 = vunpack.c.l.b16 %v977
          %v1252 = vunpack.c.h.b16 %v977
          %v1253 = vunpack.c.l.b16 %v978
          %v1254 = vunpack.c.h.b16 %v978
          %v1255 = vunpack.c.l.b16 %v979
          %v1256 = vunpack.c.h.b16 %v979
          %v1257 = vunpack.c.l.b16 %v980
          %v1258 = vunpack.c.h.b16 %v980
          %v1259 = vunpack.c.l.b16 %v981
          %v1260 = vunpack.c.h.b16 %v981
          %v1261 = vunpack.c.l.b16 %v982
          %v1262 = vunpack.c.h.b16 %v982
          %v1263 = vunpack.c.l.b16 %v983
          %v1264 = vunpack.c.h.b16 %v983
          %v1265 = vunpack.c.l.b16 %v984
          %v1266 = vunpack.c.h.b16 %v984
          %v1267 = vunpack.c.l.b16 %v985
          %v1268 = vunpack.c.h.b16 %v985
          %v1269 = vunpack.c.l.b16 %v986
          %v1270 = vunpack.c.h.b16 %v986
          %v1271 = vunpack.c.l.b16 %v987
          %v1272 = vunpack.c.h.b16 %v987
          %v1273 = vunpack.c.l.b16 %v988
          %v1274 = vunpack.c.h.b16 %v988
          %v1275 = vunpack.c.l.b16 %v989
          %v1276 = vunpack.c.h.b16 %v989
          %v1277 = vunpack.c.l.b16 %v990
          %v1278 = vunpack.c.h.b16 %v990
          %v1279 = vunpack.c.l.b16 %v991
          %v1280 = vunpack.c.h.b16 %v991
          %v1281 = vunpack.c.l.b16 %v992
          %v1282 = vunpack.c.h.b16 %v992
          %v1283 = vunpack.c.l.b16 %v993
          %v1284 = vunpack.c.h.b16 %v993
          %v1285 = vunpack.c.l.b16 %v994
          %v1286 = vunpack.c.h.b16 %v994
          %v1287 = vunpack.c.l.b16 %v995
          %v1288 = vunpack.c.h.b16 %v995
          %v1289 = vunpack.c.l.b16 %v996
          %v1290 = vunpack.c.h.b16 %v996
          %v1291 = vunpack.c.l.b16 %v997
          %v1292 = vunpack.c.h.b16 %v997
          %v1293 = vunpack.c.l.b16 %v998
          %v1294 = vunpack.c.h.b16 %v998
          %v1295 = vunpack.c.l.b16 %v999
          %v1296 = vunpack.c.h.b16 %v999
          %v1297 = vunpack.c.l.b16 %v1000
          %v1298 = vunpack.c.h.b16 %v1000
          %v1299 = vunpack.c.l.b16 %v1001
          %v1300 = vunpack.c.h.b16 %v1001
          %v1301 = vunpack.c.l.b16 %v1002
          %v1302 = vunpack.c.h.b16 %v1002
          %v1303 = vpack.c.b16 %v1113, %v1111
          %v1304 = vpack.c.b16 %v1114, %v1112
          %v1305 = vpack.c.b16 %v1117, %v1115
          %v1306 = vpack.c.b16 %v1118, %v1116
          %v1307 = vpack.c.b16 %v1121, %v1119
          %v1308 = vpack.c.b16 %v1122, %v1120
          %v1309 = vpack.c.b16 %v1125, %v1123
          %v1310 = vpack.c.b16 %v1126, %v1124
          %v1311 = vpack.c.b16 %v1129, %v1127
          %v1312 = vpack.c.b16 %v1130, %v1128
          %v1313 = vpack.c.b16 %v1133, %v1131
          %v1314 = vpack.c.b16 %v1134, %v1132
          %v1315 = vpack.c.b16 %v1137, %v1135
          %v1316 = vpack.c.b16 %v1138, %v1136
          %v1317 = vpack.c.b16 %v1141, %v1139
          %v1318 = vpack.c.b16 %v1142, %v1140
          %v1319 = vpack.c.b16 %v1145, %v1143
          %v1320 = vpack.c.b16 %v1146, %v1144
          %v1321 = vpack.c.b16 %v1149, %v1147
          %v1322 = vpack.c.b16 %v1150, %v1148
          %v1323 = vpack.c.b16 %v1153, %v1151
          %v1324 = vpack.c.b16 %v1154, %v1152
          %v1325 = vpack.c.b16 %v1157, %v1155
          %v1326 = vpack.c.b16 %v1158, %v1156
          %v1327 = vpack.c.b16 %v1161, %v1159
          %v1328 = vpack.c.b16 %v1162, %v1160
          %v1329 = vpack.c.b16 %v1165, %v1163
          %v1330 = vpack.c.b16 %v1166, %v1164
          %v1331 = vpack.c.b16 %v1169, %v1167
          %v1332 = vpack.c.b16 %v1170, %v1168
          %v1333 = vpack.c.b16 %v1173, %v1171
          %v1334 = vpack.c.b16 %v1174, %v1172
          %v1335 = vpack.c.b16 %v1177, %v1175
          %v1336 = vpack.c.b16 %v1178, %v1176
          %v1337 = vpack.c.b16 %v1181, %v1179
          %v1338 = vpack.c.b16 %v1182, %v1180
          %v1339 = vpack.c.b16 %v1185, %v1183
          %v1340 = vpack.c.b16 %v1186, %v1184
          %v1341 = vpack.c.b16 %v1189, %v1187
          %v1342 = vpack.c.b16 %v1190, %v1188
          %v1343 = vpack.c.b16 %v1193, %v1191
          %v1344 = vpack.c.b16 %v1194, %v1192
          %v1345 = vpack.c.b16 %v1197, %v1195
          %v1346 = vpack.c.b16 %v1198, %v1196
          %v1347 = vpack.c.b16 %v1201, %v1199
          %v1348 = vpack.c.b16 %v1202, %v1200
          %v1349 = vpack.c.b16 %v1205, %v1203
          %v1350 = vpack.c.b16 %v1206, %v1204
          %v1351 = vpack.c.b16 %v1209, %v1207
          %v1352 = vpack.c.b16 %v1210, %v1208
          %v1353 = vpack.c.b16 %v1213, %v1211
          %v1354 = vpack.c.b16 %v1214, %v1212
          %v1355 = vpack.c.b16 %v1217, %v1215
          %v1356 = vpack.c.b16 %v1218, %v1216
          %v1357 = vpack.c.b16 %v1221, %v1219
          %v1358 = vpack.c.b16 %v1222, %v1220
          %v1359 = vpack.c.b16 %v1225, %v1223
          %v1360 = vpack.c.b16 %v1226, %v1224
          %v1361 = vpack.c.b16 %v1229, %v1227
          %v1362 = vpack.c.b16 %v1230, %v1228
          %v1363 = vpack.c.b16 %v1233, %v1231
          %v1364 = vpack.c.b16 %v1234, %v1232
          %v1365 = vpack.c.b16 %v1237, %v1235
          %v1366 = vpack.c.b16 %v1238, %v1236
          %v1367 = vpack.c.b16 %v1241, %v1239
          %v1368 = vpack.c.b16 %v1242, %v1240
          %v1369 = vpack.c.b16 %v1245, %v1243
          %v1370 = vpack.c.b16 %v1246, %v1244
          %v1371 = vpack.c.b16 %v1249, %v1247
          %v1372 = vpack.c.b16 %v1250, %v1248
          %v1373 = vpack.c.b16 %v1253, %v1251
          %v1374 = vpack.c.b16 %v1254, %v1252
          %v1375 = vpack.c.b16 %v1257, %v1255
          %v1376 = vpack.c.b16 %v1258, %v1256
          %v1377 = vpack.c.b16 %v1261, %v1259
          %v1378 = vpack.c.b16 %v1262, %v1260
          %v1379 = vpack.c.b16 %v1265, %v1263
          %v1380 = vpack.c.b16 %v1266, %v1264
          %v1381 = vpack.c.b16 %v1269, %v1267
          %v1382 = vpack.c.b16 %v1270, %v1268
          %v1383 = vpack.c.b16 %v1273, %v1271
          %v1384 = vpack.c.b16 %v1274, %v1272
          %v1385 = vpack.c.b16 %v1277, %v1275
          %v1386 = vpack.c.b16 %v1278, %v1276
          %v1387 = vpack.c.b16 %v1281, %v1279
          %v1388 = vpack.c.b16 %v1282, %v1280
          %v1389 = vpack.c.b16 %v1285, %v1283
          %v1390 = vpack.c.b16 %v1286, %v1284
          %v1391 = vpack.c.b16 %v1289, %v1287
          %v1392 = vpack.c.b16 %v1290, %v1288
          %v1393 = vpack.c.b16 %v1293, %v1291
          %v1394 = vpack.c.b16 %v1294, %v1292
          %v1395 = vpack.c.b16 %v1297, %v1295
          %v1396 = vpack.c.b16 %v1298, %v1296
          %v1397 = vpack.c.b16 %v1301, %v1299
          %v1398 = vpack.c.b16 %v1302, %v1300
          %1495 = vmatprep.subr.bf16.mxu0 %v1304
          %1496 = vmatpush1.bf16.msra.mxu0 %v1303
          %1497 = vmatprep.subr.bf16.mxu0 %v1306
          %1498 = vmatpush1.bf16.msra.mxu0 %v1305
          %1499 = vmatprep.subr.bf16.mxu0 %v1308
          %1500 = vmatpush1.bf16.msra.mxu0 %v1307
          %1501 = vmatprep.subr.bf16.mxu0 %v1310
          %1502 = vmatpush1.bf16.msra.mxu0 %v1309
          %1503 = vmatprep.subr.bf16.mxu0 %v1312
          %1504 = vmatpush1.bf16.msra.mxu0 %v1311
          %1505 = vmatprep.subr.bf16.mxu0 %v1314
          %1506 = vmatpush1.bf16.msra.mxu0 %v1313
          %1507 = vmatprep.subr.bf16.mxu0 %v1316
          %1508 = vmatpush1.bf16.msra.mxu0 %v1315
          %1509 = vmatprep.subr.bf16.mxu0 %v1318
          %1510 = vmatpush1.bf16.msra.mxu0 %v1317
          %1511 = vmatprep.subr.bf16.mxu0 %v1320
          %1512 = vmatpush1.bf16.msra.mxu0 %v1319
          %1513 = vmatprep.subr.bf16.mxu0 %v1322
          %1514 = vmatpush1.bf16.msra.mxu0 %v1321
          %1515 = vmatprep.subr.bf16.mxu0 %v1324
          %1516 = vmatpush1.bf16.msra.mxu0 %v1323
          %1517 = vmatprep.subr.bf16.mxu0 %v1326
          %1518 = vmatpush1.bf16.msra.mxu0 %v1325
          %1519 = vmatprep.subr.bf16.mxu0 %v1328
          %1520 = vmatpush1.bf16.msra.mxu0 %v1327
          %1521 = vmatprep.subr.bf16.mxu0 %v1330
          %1522 = vmatpush1.bf16.msra.mxu0 %v1329
          %1523 = vmatprep.subr.bf16.mxu0 %v1332
          %1524 = vmatpush1.bf16.msra.mxu0 %v1331
          %1525 = vmatprep.subr.bf16.mxu0 %v1334
          %1526 = vmatpush1.bf16.msra.mxu0 %v1333
          %1527 = vmatprep.mubr.bf16.mxu0 %v902
          %1528 = vmatmul.mubr.bf16.gmra.mrb[0].mxu0 %v901
          %v1529 = vpop.f32.mrb[0].mxu0
          %v1530 = vadd.f32 %v1008, %v1529
          %v1531 = vpop.f32.mrb[0].mxu0
          %v1532 = vadd.f32 %v1012, %v1531
          %v1533 = vpop.f32.mrb[0].mxu0
          %v1534 = vpop.f32.mrb[0].mxu0
          %1535 = vdwg.mxu0
          %1536 = vmatprep.subr.bf16.mxu0 %v1336
          %1537 = vmatpush1.bf16.msra.mxu0 %v1335
          %1538 = vmatprep.subr.bf16.mxu0 %v1338
          %1539 = vmatpush1.bf16.msra.mxu0 %v1337
          %1540 = vmatprep.subr.bf16.mxu0 %v1340
          %1541 = vmatpush1.bf16.msra.mxu0 %v1339
          %1542 = vmatprep.subr.bf16.mxu0 %v1342
          %1543 = vmatpush1.bf16.msra.mxu0 %v1341
          %1544 = vmatprep.subr.bf16.mxu0 %v1344
          %1545 = vmatpush1.bf16.msra.mxu0 %v1343
          %1546 = vmatprep.subr.bf16.mxu0 %v1346
          %1547 = vmatpush1.bf16.msra.mxu0 %v1345
          %1548 = vmatprep.subr.bf16.mxu0 %v1348
          %1549 = vmatpush1.bf16.msra.mxu0 %v1347
          %1550 = vmatprep.subr.bf16.mxu0 %v1350
          %1551 = vmatpush1.bf16.msra.mxu0 %v1349
          %1552 = vmatprep.subr.bf16.mxu0 %v1352
          %1553 = vmatpush1.bf16.msra.mxu0 %v1351
          %1554 = vmatprep.subr.bf16.mxu0 %v1354
          %1555 = vmatpush1.bf16.msra.mxu0 %v1353
          %1556 = vmatprep.subr.bf16.mxu0 %v1356
          %1557 = vmatpush1.bf16.msra.mxu0 %v1355
          %1558 = vmatprep.subr.bf16.mxu0 %v1358
          %1559 = vmatpush1.bf16.msra.mxu0 %v1357
          %1560 = vmatprep.subr.bf16.mxu0 %v1360
          %1561 = vmatpush1.bf16.msra.mxu0 %v1359
          %1562 = vmatprep.subr.bf16.mxu0 %v1362
          %1563 = vmatpush1.bf16.msra.mxu0 %v1361
          %1564 = vmatprep.subr.bf16.mxu0 %v1364
          %1565 = vmatpush1.bf16.msra.mxu0 %v1363
          %1566 = vmatprep.subr.bf16.mxu0 %v1366
          %1567 = vmatpush1.bf16.msra.mxu0 %v1365
          %1568 = vmatprep.mubr.bf16.mxu0 %v904
          %1569 = vmatmul.mubr.bf16.gmra.mrb[0].mxu0 %v903
          %v1570 = vpop.f32.mrb[0].mxu0
          %v1571 = vadd.f32 %v1530, %v1570
          %v1572 = vpop.f32.mrb[0].mxu0
          %v1573 = vadd.f32 %v1532, %v1572
          %v1574 = vpop.f32.mrb[0].mxu0
          %v1575 = vpop.f32.mrb[0].mxu0
          %1576 = vdwg.mxu0
          %1577 = vmatprep.subr.bf16.mxu0 %v1368
          %1578 = vmatpush1.bf16.msra.mxu0 %v1367
          %1579 = vmatprep.subr.bf16.mxu0 %v1370
          %1580 = vmatpush1.bf16.msra.mxu0 %v1369
          %1581 = vmatprep.subr.bf16.mxu0 %v1372
          %1582 = vmatpush1.bf16.msra.mxu0 %v1371
          %1583 = vmatprep.subr.bf16.mxu0 %v1374
          %1584 = vmatpush1.bf16.msra.mxu0 %v1373
          %1585 = vmatprep.subr.bf16.mxu0 %v1376
          %1586 = vmatpush1.bf16.msra.mxu0 %v1375
          %1587 = vmatprep.subr.bf16.mxu0 %v1378
          %1588 = vmatpush1.bf16.msra.mxu0 %v1377
          %1589 = vmatprep.subr.bf16.mxu0 %v1380
          %1590 = vmatpush1.bf16.msra.mxu0 %v1379
          %1591 = vmatprep.subr.bf16.mxu0 %v1382
          %1592 = vmatpush1.bf16.msra.mxu0 %v1381
          %1593 = vmatprep.subr.bf16.mxu0 %v1384
          %1594 = vmatpush1.bf16.msra.mxu0 %v1383
          %1595 = vmatprep.subr.bf16.mxu0 %v1386
          %1596 = vmatpush1.bf16.msra.mxu0 %v1385
          %1597 = vmatprep.subr.bf16.mxu0 %v1388
          %1598 = vmatpush1.bf16.msra.mxu0 %v1387
          %1599 = vmatprep.subr.bf16.mxu0 %v1390
          %1600 = vmatpush1.bf16.msra.mxu0 %v1389
          %1601 = vmatprep.subr.bf16.mxu0 %v1392
          %1602 = vmatpush1.bf16.msra.mxu0 %v1391
          %1603 = vmatprep.subr.bf16.mxu0 %v1394
          %1604 = vmatpush1.bf16.msra.mxu0 %v1393
          %1605 = vmatprep.subr.bf16.mxu0 %v1396
          %1606 = vmatpush1.bf16.msra.mxu0 %v1395
          %1607 = vmatprep.subr.bf16.mxu0 %v1398
          %1608 = vmatpush1.bf16.msra.mxu0 %v1397
          %1609 = vmatprep.mubr.bf16.mxu0 %v906
          %1610 = vmatmul.mubr.bf16.gmra.mrb[0].mxu0 %v905
          %v1611 = vpop.f32.mrb[0].mxu0
          %v1612 = vadd.f32 %v1571, %v1611
          %v1613 = vpop.f32.mrb[0].mxu0
          %v1614 = vadd.f32 %v1573, %v1613
          %v1615 = vpop.f32.mrb[0].mxu0
          %v1616 = vpop.f32.mrb[0].mxu0
          %1617 = vdwg.mxu0
          %v1618 = vld [vmem:[%s5] sm:$0x3]
          %v1619 = vld [vmem:[%s6] sm:$0x3]
          %vm1620 = vcmask 1041408
          %v1621 = vsel %vm1620, %v1612, 0.0
          %v1622 = vsel %vm1620, %v1614, 0.0
          %v1623 = vadd.f32 %v1621, %v1622
          %1624 = vadd.xlane.f32.xlu0 %v1623
          %v1625 = vpop.xlane.xlu0 %1624
          %v1626 = vrcp.pop 256.0
          %v1627 = vmul.f32 %v1625, %v1626
          %v1628 = vsub.f32 %v1612, %v1627
          %v1629 = vsub.f32 %v1614, %v1627
          %v1630 = vmul.f32 %v1628, %v1628
          %v1631 = vmul.f32 %v1629, %v1629
          %v1632 = vsel %vm1620, %v1630, 0.0
          %v1633 = vsel %vm1620, %v1631, 0.0
          %v1634 = vadd.f32 %v1632, %v1633
          %1635 = vadd.xlane.f32.xlu0 %v1634
          %v1636 = vpop.xlane.xlu0 %1635
          %v1637 = vmul.f32 %v1636, %v1626
          %v1638 = vadd.f32 %v1637, 1e-05
          %v1639 = vrsqrt.pop %v1638
          %v1640 = vmul.f32 %v1628, %v1639
          %v1641 = vmul.f32 %v1629, %v1639
          %v1643 = vlaneseq
          %v1644 = vshrl.u32 %v1643, 7
          %v1645 = vsub.s32 0, %v1644
          %v1646 = vrot.slane %v1618, %v1645
          %v1647 = vlaneseq
          %v1648 = vshrl.u32 %v1647, 7
          %v1649 = vsub.s32 1, %v1648
          %v1650 = vrot.slane %v1618, %v1649
          %v1653 = vmul.f32 %v1640, %v1646
          %v1654 = vmul.f32 %v1641, %v1650
          %v1656 = vlaneseq
          %v1657 = vshrl.u32 %v1656, 7
          %v1658 = vsub.s32 0, %v1657
          %v1659 = vrot.slane %v1619, %v1658
          %v1660 = vlaneseq
          %v1661 = vshrl.u32 %v1660, 7
          %v1662 = vsub.s32 1, %v1661
          %v1663 = vrot.slane %v1619, %v1662
          %v1666 = vadd.f32 %v1653, %v1659
          %v1667 = vadd.f32 %v1654, %v1663
          %v1668 = vld [vmem:[%s7] sm:$0xff]
          %v1669 = vld [vmem:[%s7 + $0x8] sm:$0xff]
          %v1670 = vld [vmem:[%s7 + $0x10] sm:$0xff]
          %v1671 = vld [vmem:[%s7 + $0x18] sm:$0xff]
          %v1672 = vld [vmem:[%s7 + $0x20] sm:$0xff]
          %v1673 = vld [vmem:[%s7 + $0x28] sm:$0xff]
          %v1674 = vld [vmem:[%s7 + $0x30] sm:$0xff]
          %v1675 = vld [vmem:[%s7 + $0x38] sm:$0xff]
          %v1676 = vld [vmem:[%s7 + $0x40] sm:$0xff]
          %v1677 = vld [vmem:[%s7 + $0x48] sm:$0xff]
          %v1678 = vld [vmem:[%s7 + $0x50] sm:$0xff]
          %v1679 = vld [vmem:[%s7 + $0x58] sm:$0xff]
          %v1680 = vld [vmem:[%s7 + $0x60] sm:$0xff]
          %v1681 = vld [vmem:[%s7 + $0x68] sm:$0xff]
          %v1682 = vld [vmem:[%s7 + $0x70] sm:$0xff]
          %v1683 = vld [vmem:[%s7 + $0x78] sm:$0xff]
          %v1684 = vld [vmem:[%s7 + $0x80] sm:$0xff]
          %v1685 = vld [vmem:[%s7 + $0x88] sm:$0xff]
          %v1686 = vld [vmem:[%s7 + $0x90] sm:$0xff]
          %v1687 = vld [vmem:[%s7 + $0x98] sm:$0xff]
          %v1688 = vld [vmem:[%s7 + $0xa0] sm:$0xff]
          %v1689 = vld [vmem:[%s7 + $0xa8] sm:$0xff]
          %v1690 = vld [vmem:[%s7 + $0xb0] sm:$0xff]
          %v1691 = vld [vmem:[%s7 + $0xb8] sm:$0xff]
          %v1692 = vld [vmem:[%s7 + $0xc0] sm:$0xff]
          %v1693 = vld [vmem:[%s7 + $0xc8] sm:$0xff]
          %v1694 = vld [vmem:[%s7 + $0xd0] sm:$0xff]
          %v1695 = vld [vmem:[%s7 + $0xd8] sm:$0xff]
          %v1696 = vld [vmem:[%s7 + $0xe0] sm:$0xff]
          %v1697 = vld [vmem:[%s7 + $0xe8] sm:$0xff]
          %v1698 = vld [vmem:[%s7 + $0xf0] sm:$0xff]
          %v1699 = vld [vmem:[%s7 + $0xf8] sm:$0xff]
          %v1700 = vld [vmem:[%s8] sm:$0x1]
          %v1702 = vlaneseq
          %v1703 = vshrl.u32 %v1702, 7
          %v1704 = vsub.s32 0, %v1703
          %v1705 = vrot.slane %v1700, %v1704
          %1707 = vmatprep.subr.mxu0 0.0
          %1708 = vmatpush1.msra.mxu0 %v1668
          %1709 = vmatprep.subr.mxu0 0.0
          %1710 = vmatpush1.msra.mxu0 %v1669
          %1711 = vmatprep.subr.mxu0 0.0
          %1712 = vmatpush1.msra.mxu0 %v1670
          %1713 = vmatprep.subr.mxu0 0.0
          %1714 = vmatpush1.msra.mxu0 %v1671
          %1715 = vmatprep.subr.mxu0 0.0
          %1716 = vmatpush1.msra.mxu0 %v1672
          %1717 = vmatprep.subr.mxu0 0.0
          %1718 = vmatpush1.msra.mxu0 %v1673
          %1719 = vmatprep.subr.mxu0 0.0
          %1720 = vmatpush1.msra.mxu0 %v1674
          %1721 = vmatprep.subr.mxu0 0.0
          %1722 = vmatpush1.msra.mxu0 %v1675
          %1723 = vmatprep.subr.mxu0 0.0
          %1724 = vmatpush1.msra.mxu0 %v1676
          %1725 = vmatprep.subr.mxu0 0.0
          %1726 = vmatpush1.msra.mxu0 %v1677
          %1727 = vmatprep.subr.mxu0 0.0
          %1728 = vmatpush1.msra.mxu0 %v1678
          %1729 = vmatprep.subr.mxu0 0.0
          %1730 = vmatpush1.msra.mxu0 %v1679
          %1731 = vmatprep.subr.mxu0 0.0
          %1732 = vmatpush1.msra.mxu0 %v1680
          %1733 = vmatprep.subr.mxu0 0.0
          %1734 = vmatpush1.msra.mxu0 %v1681
          %1735 = vmatprep.subr.mxu0 0.0
          %1736 = vmatpush1.msra.mxu0 %v1682
          %1737 = vmatprep.subr.mxu0 0.0
          %1738 = vmatpush1.msra.mxu0 %v1683
          %1739 = vmatprep.subr.mxu0 0.0
          %1740 = vmatpush1.msra.mxu0 %v1684
          %1741 = vmatprep.subr.mxu0 0.0
          %1742 = vmatpush1.msra.mxu0 %v1685
          %1743 = vmatprep.subr.mxu0 0.0
          %1744 = vmatpush1.msra.mxu0 %v1686
          %1745 = vmatprep.subr.mxu0 0.0
          %1746 = vmatpush1.msra.mxu0 %v1687
          %1747 = vmatprep.subr.mxu0 0.0
          %1748 = vmatpush1.msra.mxu0 %v1688
          %1749 = vmatprep.subr.mxu0 0.0
          %1750 = vmatpush1.msra.mxu0 %v1689
          %1751 = vmatprep.subr.mxu0 0.0
          %1752 = vmatpush1.msra.mxu0 %v1690
          %1753 = vmatprep.subr.mxu0 0.0
          %1754 = vmatpush1.msra.mxu0 %v1691
          %1755 = vmatprep.subr.mxu0 0.0
          %1756 = vmatpush1.msra.mxu0 %v1692
          %1757 = vmatprep.subr.mxu0 0.0
          %1758 = vmatpush1.msra.mxu0 %v1693
          %1759 = vmatprep.subr.mxu0 0.0
          %1760 = vmatpush1.msra.mxu0 %v1694
          %1761 = vmatprep.subr.mxu0 0.0
          %1762 = vmatpush1.msra.mxu0 %v1695
          %1763 = vmatprep.subr.mxu0 0.0
          %1764 = vmatpush1.msra.mxu0 %v1696
          %1765 = vmatprep.subr.mxu0 0.0
          %1766 = vmatpush1.msra.mxu0 %v1697
          %1767 = vmatprep.subr.mxu0 0.0
          %1768 = vmatpush1.msra.mxu0 %v1698
          %1769 = vmatprep.subr.mxu0 0.0
          %1770 = vmatpush1.msra.mxu0 %v1699
          %1771 = vmatprep.mubr.f32.mxu0 %v1667
          %1772 = vmatmul.mubr.f32.gmra.mrb[0].mxu0 %v1666
          %v1773 = vpop.f32.mrb[0].mxu0
          %v1774 = vadd.f32 %v1705, %v1773
          %v1775 = vpop.f32.mrb[0].mxu0
          %1776 = vdwg.mxu0
          %v1777 = vsel %vm1620, %v1666, -inf
          %v1778 = vrot.slane %v1777, 4
          %v1779 = vmax.f32 %v1777, %v1778
          %v1780 = vrot.slane %v1779, 2
          %v1781 = vmax.f32 %v1779, %v1780
          %v1782 = vrot.slane %v1781, 1
          %v1783 = vmax.f32 %v1781, %v1782
          %v1784 = vsel %vm1620, %v1667, -inf
          %v1785 = vrot.slane %v1784, 4
          %v1786 = vmax.f32 %v1784, %v1785
          %v1787 = vrot.slane %v1786, 2
          %v1788 = vmax.f32 %v1786, %v1787
          %v1789 = vrot.slane %v1788, 1
          %v1790 = vmax.f32 %v1788, %v1789
          %v1791 = vpack.c.bf16 %v1783, %v1783
          %v1792 = vpack.c.bf16 %v1790, %v1790
          %v1793 = vld [vmem:[#allocation4] sm:$0xff]
          %v1794 = vld [vmem:[#allocation4 + $0x8] sm:$0xff]
          %v1795 = vld [vmem:[#allocation4 + $0x10] sm:$0xff]
          %v1796 = vld [vmem:[#allocation4 + $0x18] sm:$0xff]
          %v1797 = vld [vmem:[#allocation4 + $0x20] sm:$0xff]
          %v1798 = vld [vmem:[#allocation4 + $0x28] sm:$0xff]
          %v1799 = vld [vmem:[#allocation4 + $0x30] sm:$0xff]
          %v1800 = vld [vmem:[#allocation4 + $0x38] sm:$0xff]
          %v1801 = vld [vmem:[#allocation4 + $0x40] sm:$0xff]
          %v1802 = vld [vmem:[#allocation4 + $0x48] sm:$0xff]
          %v1803 = vld [vmem:[#allocation4 + $0x50] sm:$0xff]
          %v1804 = vld [vmem:[#allocation4 + $0x58] sm:$0xff]
          %v1805 = vld [vmem:[#allocation4 + $0x60] sm:$0xff]
          %v1806 = vld [vmem:[#allocation4 + $0x68] sm:$0xff]
          %v1807 = vld [vmem:[#allocation4 + $0x70] sm:$0xff]
          %v1808 = vld [vmem:[#allocation4 + $0x78] sm:$0xff]
          %v1809 = vld [vmem:[#allocation4 + $0x80] sm:$0xff]
          %v1810 = vld [vmem:[#allocation4 + $0x88] sm:$0xff]
          %v1811 = vld [vmem:[#allocation4 + $0x90] sm:$0xff]
          %v1812 = vld [vmem:[#allocation4 + $0x98] sm:$0xff]
          %v1813 = vld [vmem:[#allocation4 + $0xa0] sm:$0xff]
          %v1814 = vld [vmem:[#allocation4 + $0xa8] sm:$0xff]
          %v1815 = vld [vmem:[#allocation4 + $0xb0] sm:$0xff]
          %v1816 = vld [vmem:[#allocation4 + $0xb8] sm:$0xff]
          %v1817 = vld [vmem:[#allocation4 + $0xc0] sm:$0xff]
          %v1818 = vld [vmem:[#allocation4 + $0xc8] sm:$0xff]
          %v1819 = vld [vmem:[#allocation4 + $0xd0] sm:$0xff]
          %v1820 = vld [vmem:[#allocation4 + $0xd8] sm:$0xff]
          %v1821 = vld [vmem:[#allocation4 + $0xe0] sm:$0xff]
          %v1822 = vld [vmem:[#allocation4 + $0xe8] sm:$0xff]
          %v1823 = vld [vmem:[#allocation4 + $0xf0] sm:$0xff]
          %v1824 = vld [vmem:[#allocation4 + $0xf8] sm:$0xff]
          %v1825 = vld [vmem:[%s10] sm:$0x3]
          %v1858 = vunpack.c.l.b16 %v1793
          %v1859 = vunpack.c.h.b16 %v1793
          %v1860 = vunpack.c.l.b16 %v1794
          %v1861 = vunpack.c.h.b16 %v1794
          %v1862 = vunpack.c.l.b16 %v1795
          %v1863 = vunpack.c.h.b16 %v1795
          %v1864 = vunpack.c.l.b16 %v1796
          %v1865 = vunpack.c.h.b16 %v1796
          %v1866 = vunpack.c.l.b16 %v1797
          %v1867 = vunpack.c.h.b16 %v1797
          %v1868 = vunpack.c.l.b16 %v1798
          %v1869 = vunpack.c.h.b16 %v1798
          %v1870 = vunpack.c.l.b16 %v1799
          %v1871 = vunpack.c.h.b16 %v1799
          %v1872 = vunpack.c.l.b16 %v1800
          %v1873 = vunpack.c.h.b16 %v1800
          %v1874 = vunpack.c.l.b16 %v1801
          %v1875 = vunpack.c.h.b16 %v1801
          %v1876 = vunpack.c.l.b16 %v1802
          %v1877 = vunpack.c.h.b16 %v1802
          %v1878 = vunpack.c.l.b16 %v1803
          %v1879 = vunpack.c.h.b16 %v1803
          %v1880 = vunpack.c.l.b16 %v1804
          %v1881 = vunpack.c.h.b16 %v1804
          %v1882 = vunpack.c.l.b16 %v1805
          %v1883 = vunpack.c.h.b16 %v1805
          %v1884 = vunpack.c.l.b16 %v1806
          %v1885 = vunpack.c.h.b16 %v1806
          %v1886 = vunpack.c.l.b16 %v1807
          %v1887 = vunpack.c.h.b16 %v1807
          %v1888 = vunpack.c.l.b16 %v1808
          %v1889 = vunpack.c.h.b16 %v1808
          %v1890 = vunpack.c.l.b16 %v1809
          %v1891 = vunpack.c.h.b16 %v1809
          %v1892 = vunpack.c.l.b16 %v1810
          %v1893 = vunpack.c.h.b16 %v1810
          %v1894 = vunpack.c.l.b16 %v1811
          %v1895 = vunpack.c.h.b16 %v1811
          %v1896 = vunpack.c.l.b16 %v1812
          %v1897 = vunpack.c.h.b16 %v1812
          %v1898 = vunpack.c.l.b16 %v1813
          %v1899 = vunpack.c.h.b16 %v1813
          %v1900 = vunpack.c.l.b16 %v1814
          %v1901 = vunpack.c.h.b16 %v1814
          %v1902 = vunpack.c.l.b16 %v1815
          %v1903 = vunpack.c.h.b16 %v1815
          %v1904 = vunpack.c.l.b16 %v1816
          %v1905 = vunpack.c.h.b16 %v1816
          %v1906 = vunpack.c.l.b16 %v1817
          %v1907 = vunpack.c.h.b16 %v1817
          %v1908 = vunpack.c.l.b16 %v1818
          %v1909 = vunpack.c.h.b16 %v1818
          %v1910 = vunpack.c.l.b16 %v1819
          %v1911 = vunpack.c.h.b16 %v1819
          %v1912 = vunpack.c.l.b16 %v1820
          %v1913 = vunpack.c.h.b16 %v1820
          %v1914 = vunpack.c.l.b16 %v1821
          %v1915 = vunpack.c.h.b16 %v1821
          %v1916 = vunpack.c.l.b16 %v1822
          %v1917 = vunpack.c.h.b16 %v1822
          %v1918 = vunpack.c.l.b16 %v1823
          %v1919 = vunpack.c.h.b16 %v1823
          %v1920 = vunpack.c.l.b16 %v1824
          %v1921 = vunpack.c.h.b16 %v1824
          %v1922 = vpack.c.b16 %v1860, %v1858
          %v1923 = vpack.c.b16 %v1861, %v1859
          %v1924 = vpack.c.b16 %v1864, %v1862
          %v1925 = vpack.c.b16 %v1865, %v1863
          %v1926 = vpack.c.b16 %v1868, %v1866
          %v1927 = vpack.c.b16 %v1869, %v1867
          %v1928 = vpack.c.b16 %v1872, %v1870
          %v1929 = vpack.c.b16 %v1873, %v1871
          %v1930 = vpack.c.b16 %v1876, %v1874
          %v1931 = vpack.c.b16 %v1877, %v1875
          %v1932 = vpack.c.b16 %v1880, %v1878
          %v1933 = vpack.c.b16 %v1881, %v1879
          %v1934 = vpack.c.b16 %v1884, %v1882
          %v1935 = vpack.c.b16 %v1885, %v1883
          %v1936 = vpack.c.b16 %v1888, %v1886
          %v1937 = vpack.c.b16 %v1889, %v1887
          %v1938 = vpack.c.b16 %v1892, %v1890
          %v1939 = vpack.c.b16 %v1893, %v1891
          %v1940 = vpack.c.b16 %v1896, %v1894
          %v1941 = vpack.c.b16 %v1897, %v1895
          %v1942 = vpack.c.b16 %v1900, %v1898
          %v1943 = vpack.c.b16 %v1901, %v1899
          %v1944 = vpack.c.b16 %v1904, %v1902
          %v1945 = vpack.c.b16 %v1905, %v1903
          %v1946 = vpack.c.b16 %v1908, %v1906
          %v1947 = vpack.c.b16 %v1909, %v1907
          %v1948 = vpack.c.b16 %v1912, %v1910
          %v1949 = vpack.c.b16 %v1913, %v1911
          %v1950 = vpack.c.b16 %v1916, %v1914
          %v1951 = vpack.c.b16 %v1917, %v1915
          %v1952 = vpack.c.b16 %v1920, %v1918
          %v1953 = vpack.c.b16 %v1921, %v1919
          %v1987 = vlaneseq
          %v1988 = vshrl.u32 %v1987, 7
          %v1989 = vsub.s32 0, %v1988
          %v1990 = vrot.slane %v1825, %v1989
          %v1991 = vlaneseq
          %v1992 = vshrl.u32 %v1991, 7
          %v1993 = vsub.s32 1, %v1992
          %v1994 = vrot.slane %v1825, %v1993
          %1997 = vmatprep.subr.bf16.mxu0 %v1923
          %1998 = vmatpush1.bf16.msra.mxu0 %v1922
          %1999 = vmatprep.subr.bf16.mxu0 %v1925
          %2000 = vmatpush1.bf16.msra.mxu0 %v1924
          %2001 = vmatprep.subr.bf16.mxu0 %v1927
          %2002 = vmatpush1.bf16.msra.mxu0 %v1926
          %2003 = vmatprep.subr.bf16.mxu0 %v1929
          %2004 = vmatpush1.bf16.msra.mxu0 %v1928
          %2005 = vmatprep.subr.bf16.mxu0 %v1931
          %2006 = vmatpush1.bf16.msra.mxu0 %v1930
          %2007 = vmatprep.subr.bf16.mxu0 %v1933
          %2008 = vmatpush1.bf16.msra.mxu0 %v1932
          %2009 = vmatprep.subr.bf16.mxu0 %v1935
          %2010 = vmatpush1.bf16.msra.mxu0 %v1934
          %2011 = vmatprep.subr.bf16.mxu0 %v1937
          %2012 = vmatpush1.bf16.msra.mxu0 %v1936
          %2013 = vmatprep.subr.bf16.mxu0 %v1939
          %2014 = vmatpush1.bf16.msra.mxu0 %v1938
          %2015 = vmatprep.subr.bf16.mxu0 %v1941
          %2016 = vmatpush1.bf16.msra.mxu0 %v1940
          %2017 = vmatprep.subr.bf16.mxu0 %v1943
          %2018 = vmatpush1.bf16.msra.mxu0 %v1942
          %2019 = vmatprep.subr.bf16.mxu0 %v1945
          %2020 = vmatpush1.bf16.msra.mxu0 %v1944
          %2021 = vmatprep.subr.bf16.mxu0 %v1947
          %2022 = vmatpush1.bf16.msra.mxu0 %v1946
          %2023 = vmatprep.subr.bf16.mxu0 %v1949
          %2024 = vmatpush1.bf16.msra.mxu0 %v1948
          %2025 = vmatprep.subr.bf16.mxu0 %v1951
          %2026 = vmatpush1.bf16.msra.mxu0 %v1950
          %2027 = vmatprep.subr.bf16.mxu0 %v1953
          %2028 = vmatpush1.bf16.msra.mxu0 %v1952
          %2029 = vmatprep.mubr.bf16.mxu0 %v1792
          %2030 = vmatmul.mubr.bf16.gmra.mrb[0].mxu0 %v1791
          %v2031 = vpop.f32.mrb[0].mxu0
          %v2032 = vadd.f32 %v1990, %v2031
          %v2033 = vpop.f32.mrb[0].mxu0
          %v2034 = vadd.f32 %v1994, %v2033
          %v2035 = vpop.f32.mrb[0].mxu0
          %v2036 = vpop.f32.mrb[0].mxu0
          %2037 = vdwg.mxu0
          %v2038 = vmax.f32 %v2032, 0.0
          %v2039 = vmax.f32 %v2034, 0.0
          %v2040 = vld [vmem:[%s11] sm:$0x3]
          %v2041 = vld [vmem:[%s12] sm:$0x3]
          %vm2042 = vcmask 1040384
          %v2043 = vsel %vm2042, %v2038, 0.0
          %v2044 = vsel %vm2042, %v2039, 0.0
          %v2045 = vadd.f32 %v2043, %v2044
          %2046 = vadd.xlane.f32.xlu0 %v2045
          %v2047 = vpop.xlane.xlu0 %2046
          %v2048 = vmul.f32 %v2047, %v1626
          %v2049 = vsub.f32 %v2038, %v2048
          %v2050 = vsub.f32 %v2039, %v2048
          %v2051 = vmul.f32 %v2049, %v2049
          %v2052 = vmul.f32 %v2050, %v2050
          %v2053 = vsel %vm2042, %v2051, 0.0
          %v2054 = vsel %vm2042, %v2052, 0.0
          %v2055 = vadd.f32 %v2053, %v2054
          %2056 = vadd.xlane.f32.xlu0 %v2055
          %v2057 = vpop.xlane.xlu0 %2056
          %v2058 = vmul.f32 %v2057, %v1626
          %v2059 = vadd.f32 %v2058, 1e-05
          %v2060 = vrsqrt.pop %v2059
          %v2061 = vmul.f32 %v2049, %v2060
          %v2062 = vmul.f32 %v2050, %v2060
          %v2064 = vlaneseq
          %v2065 = vshrl.u32 %v2064, 7
          %v2066 = vsub.s32 0, %v2065
          %v2067 = vrot.slane %v2040, %v2066
          %v2068 = vlaneseq
          %v2069 = vshrl.u32 %v2068, 7
          %v2070 = vsub.s32 1, %v2069
          %v2071 = vrot.slane %v2040, %v2070
          %v2074 = vmul.f32 %v2061, %v2067
          %v2075 = vmul.f32 %v2062, %v2071
          %v2077 = vlaneseq
          %v2078 = vshrl.u32 %v2077, 7
          %v2079 = vsub.s32 0, %v2078
          %v2080 = vrot.slane %v2041, %v2079
          %v2081 = vlaneseq
          %v2082 = vshrl.u32 %v2081, 7
          %v2083 = vsub.s32 1, %v2082
          %v2084 = vrot.slane %v2041, %v2083
          %v2087 = vadd.f32 %v2074, %v2080
          %v2088 = vadd.f32 %v2075, %v2084
          %v2089 = vld [vmem:[#allocation6] sm:$0xff]
          %v2090 = vld [vmem:[#allocation6 + $0x8] sm:$0xff]
          %v2091 = vld [vmem:[#allocation6 + $0x10] sm:$0xff]
          %v2092 = vld [vmem:[#allocation6 + $0x18] sm:$0xff]
          %v2093 = vld [vmem:[#allocation6 + $0x20] sm:$0xff]
          %v2094 = vld [vmem:[#allocation6 + $0x28] sm:$0xff]
          %v2095 = vld [vmem:[#allocation6 + $0x30] sm:$0xff]
          %v2096 = vld [vmem:[#allocation6 + $0x38] sm:$0xff]
          %v2097 = vld [vmem:[#allocation6 + $0x40] sm:$0xff]
          %v2098 = vld [vmem:[#allocation6 + $0x48] sm:$0xff]
          %v2099 = vld [vmem:[#allocation6 + $0x50] sm:$0xff]
          %v2100 = vld [vmem:[#allocation6 + $0x58] sm:$0xff]
          %v2101 = vld [vmem:[#allocation6 + $0x60] sm:$0xff]
          %v2102 = vld [vmem:[#allocation6 + $0x68] sm:$0xff]
          %v2103 = vld [vmem:[#allocation6 + $0x70] sm:$0xff]
          %v2104 = vld [vmem:[#allocation6 + $0x78] sm:$0xff]
          %v2105 = vld [vmem:[#allocation6 + $0x80] sm:$0xff]
          %v2106 = vld [vmem:[#allocation6 + $0x88] sm:$0xff]
          %v2107 = vld [vmem:[#allocation6 + $0x90] sm:$0xff]
          %v2108 = vld [vmem:[#allocation6 + $0x98] sm:$0xff]
          %v2109 = vld [vmem:[#allocation6 + $0xa0] sm:$0xff]
          %v2110 = vld [vmem:[#allocation6 + $0xa8] sm:$0xff]
          %v2111 = vld [vmem:[#allocation6 + $0xb0] sm:$0xff]
          %v2112 = vld [vmem:[#allocation6 + $0xb8] sm:$0xff]
          %v2113 = vld [vmem:[#allocation6 + $0xc0] sm:$0xff]
          %v2114 = vld [vmem:[#allocation6 + $0xc8] sm:$0xff]
          %v2115 = vld [vmem:[#allocation6 + $0xd0] sm:$0xff]
          %v2116 = vld [vmem:[#allocation6 + $0xd8] sm:$0xff]
          %v2117 = vld [vmem:[#allocation6 + $0xe0] sm:$0xff]
          %v2118 = vld [vmem:[#allocation6 + $0xe8] sm:$0xff]
          %v2119 = vld [vmem:[#allocation6 + $0xf0] sm:$0xff]
          %v2120 = vld [vmem:[#allocation6 + $0xf8] sm:$0xff]
          %v2121 = vld [vmem:[%s14] sm:$0x1]
          %2122 = vmatprep.subr.mxu0 0.0
          %2123 = vmatpush1.msra.mxu0 %v2089
          %2124 = vmatprep.subr.mxu0 0.0
          %2125 = vmatpush1.msra.mxu0 %v2090
          %2126 = vmatprep.subr.mxu0 0.0
          %2127 = vmatpush1.msra.mxu0 %v2091
          %2128 = vmatprep.subr.mxu0 0.0
          %2129 = vmatpush1.msra.mxu0 %v2092
          %2130 = vmatprep.subr.mxu0 0.0
          %2131 = vmatpush1.msra.mxu0 %v2093
          %2132 = vmatprep.subr.mxu0 0.0
          %2133 = vmatpush1.msra.mxu0 %v2094
          %2134 = vmatprep.subr.mxu0 0.0
          %2135 = vmatpush1.msra.mxu0 %v2095
          %2136 = vmatprep.subr.mxu0 0.0
          %2137 = vmatpush1.msra.mxu0 %v2096
          %2138 = vmatprep.subr.mxu0 0.0
          %2139 = vmatpush1.msra.mxu0 %v2097
          %2140 = vmatprep.subr.mxu0 0.0
          %2141 = vmatpush1.msra.mxu0 %v2098
          %2142 = vmatprep.subr.mxu0 0.0
          %2143 = vmatpush1.msra.mxu0 %v2099
          %2144 = vmatprep.subr.mxu0 0.0
          %2145 = vmatpush1.msra.mxu0 %v2100
          %2146 = vmatprep.subr.mxu0 0.0
          %2147 = vmatpush1.msra.mxu0 %v2101
          %2148 = vmatprep.subr.mxu0 0.0
          %2149 = vmatpush1.msra.mxu0 %v2102
          %2150 = vmatprep.subr.mxu0 0.0
          %2151 = vmatpush1.msra.mxu0 %v2103
          %2152 = vmatprep.subr.mxu0 0.0
          %2153 = vmatpush1.msra.mxu0 %v2104
          %2154 = vmatprep.subr.mxu0 0.0
          %2155 = vmatpush1.msra.mxu0 %v2105
          %2156 = vmatprep.subr.mxu0 0.0
          %2157 = vmatpush1.msra.mxu0 %v2106
          %2158 = vmatprep.subr.mxu0 0.0
          %2159 = vmatpush1.msra.mxu0 %v2107
          %2160 = vmatprep.subr.mxu0 0.0
          %2161 = vmatpush1.msra.mxu0 %v2108
          %2162 = vmatprep.subr.mxu0 0.0
          %2163 = vmatpush1.msra.mxu0 %v2109
          %2164 = vmatprep.subr.mxu0 0.0
          %2165 = vmatpush1.msra.mxu0 %v2110
          %2166 = vmatprep.subr.mxu0 0.0
          %2167 = vmatpush1.msra.mxu0 %v2111
          %2168 = vmatprep.subr.mxu0 0.0
          %2169 = vmatpush1.msra.mxu0 %v2112
          %2170 = vmatprep.subr.mxu0 0.0
          %2171 = vmatpush1.msra.mxu0 %v2113
          %2172 = vmatprep.subr.mxu0 0.0
          %2173 = vmatpush1.msra.mxu0 %v2114
          %2174 = vmatprep.subr.mxu0 0.0
          %2175 = vmatpush1.msra.mxu0 %v2115
          %2176 = vmatprep.subr.mxu0 0.0
          %2177 = vmatpush1.msra.mxu0 %v2116
          %2178 = vmatprep.subr.mxu0 0.0
          %2179 = vmatpush1.msra.mxu0 %v2117
          %2180 = vmatprep.subr.mxu0 0.0
          %2181 = vmatpush1.msra.mxu0 %v2118
          %2182 = vmatprep.subr.mxu0 0.0
          %2183 = vmatpush1.msra.mxu0 %v2119
          %2184 = vmatprep.subr.mxu0 0.0
          %2185 = vmatpush1.msra.mxu0 %v2120
          %2186 = vmatprep.mubr.f32.mxu0 %v2088
          %2187 = vmatmul.mubr.f32.gmra.mrb[0].mxu0 %v2087
          %v2188 = vpop.f32.mrb[0].mxu0
          %v2189 = vadd.f32 %v2121, %v2188
          %v2190 = vpop.f32.mrb[0].mxu0
          %2191 = vdwg.mxu0
          %v2193 = vrot.slane %v2189, 6
          %v2195 = vsel %vm1620, %v1774, %v2193
          %2196 = vst [vmem:[%s565] sm:$0x7] %v2195
        $region119: #{xin_multimodal_net_n15_forward.1} parent=98 // pred_fallthru
          _
        %p2197 = scmp.lt.s32.totalorder %s32, 1
        %s2198 = scalar_select %p2197, %s32, 1
        %s2199 = smul.addr %s2198, 4
        %s2200 = scalar_lea.vmem %s15, %s2199
        // Predicated region
        $region120: #{xin_multimodal_net_n15_forward.1} parent=98 // pred_check
          %p2201 = pneg %p380
        $region121: #{xin_multimodal_net_n15_forward.1} parent=98 // pred_check_branch
          %2203 = sbr.rel (%p2201) target = $region123
        $region122: #{xin_multimodal_net_n15_forward.1} parent=98 // pred_region
          _
        $region123: #{xin_multimodal_net_n15_forward.1} parent=98 // pred_fallthru
          _
      $region99: #{xin_multimodal_net_n15_forward.1} parent=5 // pred_fallthru
        _
      %p2204 = scmp.le.s32.totalorder 2, %s23
      // Predicated region
      $region124: #{xin_multimodal_net_n15_forward.1} parent=5 // pred_check
        %p2205 = pneg %p2204
      $region125: #{xin_multimodal_net_n15_forward.1} parent=5 // pred_check_branch
        %2207 = sbr.rel (%p2205) target = $region127
      $region126: #{xin_multimodal_net_n15_forward.1} parent=5 // pred_region
        %s2208 = ssub.s32 %s23, 2
        // Predicated region
        $region128: #{xin_multimodal_net_n15_forward.1} parent=126 // pred_check
          %p2209 = pneg %p386
        $region129: #{xin_multimodal_net_n15_forward.1} parent=126 // pred_check_branch
          %2211 = sbr.rel (%p2209) target = $region131
        $region130: #{xin_multimodal_net_n15_forward.1} parent=126 // pred_region
          %p2212 = scmp.lt.s32.totalorder %s34, 1
          %s2213 = scalar_select %p2212, %s34, 1
          %s2214 = smul.addr %s2213, 4
          %s2215 = scalar_lea.vmem %s15, %s2214
        $region131: #{xin_multimodal_net_n15_forward.1} parent=126 // pred_fallthru
          _
      $region127: #{xin_multimodal_net_n15_forward.1} parent=5 // pred_fallthru
        _
    $region6: #{xin_multimodal_net_n15_forward.1} parent=1 // loop_footer
      %s27 = sadd.s32 1, %s23
    $region7: #{xin_multimodal_net_n15_forward.1} parent=1 // loop_footer_branch
      %22 = sbr.rel target = $region3
    $region8: #{xin_multimodal_net_n15_forward.1} parent=1 // loop_exit
      _
    %2216 = vsyncpa [#allocation5], 1
    %s2217 = scalar_lea.sflag [#allocation5], 1
    %2218 = vsyncpa %s2217, 1
    %2219 = vsyncpa [#allocation7], 1

</llo_original>
